<compile_context>
chip_gen: v6e
topology: v6e:2x2x1
jax: 0.10.0
libtpu: 0.0.40
codegen_flags: <defaults>
</compile_context>

<pallas_src>
import functools

import jax
import jax.numpy as jnp
from jax.experimental import pallas as pl
from jax.experimental.pallas import tpu as pltpu


def _round_up(x, m):
    return (x + m - 1) // m * m


def _ds_kernel(u_ref, *args, relu_flags, tb, batch):
    """One batch tile: (tb, Ep) rows of u -> one (1, 8, 128) partial-sum slab."""
    out_ref = args[-1]
    wb_refs = args[:-1]

    u = u_ref[...]                                        # (tb, Ep) f32 (kept for diff)
    h = u
    for li, do_relu in enumerate(relu_flags):
        w = wb_refs[2 * li][...]                          # (in, out)  bf16
        b = wb_refs[2 * li + 1][...]                      # (1,  out)  f32
        # bf16 x bf16 on the MXU, f32 accumulate.
        h = jnp.dot(h.astype(w.dtype), w, preferred_element_type=jnp.float32) + b
        if do_relu:
            h = jnp.maximum(h, 0.0)

    # F.normalize(x, dim=1): x / max(||x||, 1e-12) == x * rsqrt(max(||x||^2, 1e-24))
    sumsq = jnp.sum(h * h, axis=1, keepdims=True)          # (tb, 1)
    xn = h * jax.lax.rsqrt(jnp.maximum(sumsq, 1e-24))      # rsqrt on the EUP

    # per-row L2 distance to the f32 input
    diff = xn - u
    d = jnp.sqrt(jnp.sum(diff * diff, axis=1, keepdims=True))   # (tb, 1)

    # mask batch-padding rows of the (possibly ragged) last tile
    row0 = pl.program_id(0) * tb
    row_ids = row0 + jax.lax.broadcasted_iota(jnp.int32, (tb, 1), 0)
    valid = (row_ids < batch).astype(jnp.float32)

    partial = jnp.sum(d * valid)                           # scalar partial sum
    # lane-dense (8,128) slab -> unmasked full-vreg store
    out_ref[...] = jnp.full(out_ref.shape, partial, jnp.float32)


def prepare_ds_weights(params):
    """One-time (per weight update) prep: middle-layer fusion, lane padding, bf16 cast."""
    E, H = params["w1"].shape
    Ep, Hp = _round_up(E, 128), _round_up(H, 128)
    f32 = jnp.float32
    hi = jax.lax.Precision.HIGHEST

    # Fuse the two middle linears (no nonlinearity between them) only when it
    # reduces per-row MACs: Hp*Hp < 2*Ep*Hp  <=>  Hp < 2*Ep.
    fuse_mid = Hp * Hp < 2 * Ep * Hp
    if fuse_mid:
        w23 = jnp.dot(params["w2"].astype(f32), params["w3"].astype(f32), precision=hi)
        b23 = (jnp.dot(params["b2"].astype(f32), params["w3"].astype(f32), precision=hi)
               + params["b3"].astype(f32))
        layers = [
            (params["w1"], params["b1"], Ep, Hp, True),
            (w23,          b23,          Hp, Hp, True),
            (params["w4"], params["b4"], Hp, Ep, False),
        ]
    else:
        layers = [
            (params["w1"], params["b1"], Ep, Hp, True),
            (params["w2"], params["b2"], Hp, Ep, False),
            (params["w3"], params["b3"], Ep, Hp, True),
            (params["w4"], params["b4"], Hp, Ep, False),
        ]

    def pad2(a, r, c, dtype):
        a = a.astype(f32)
        a = jnp.pad(a, ((0, r - a.shape[0]), (0, c - a.shape[1])))
        return a.astype(dtype)

    weights, biases, relu_flags = [], [], []
    for w, b, din, dout, relu in layers:
        weights.append(pad2(w, din, dout, jnp.bfloat16))   # MXU operand
        biases.append(pad2(b, 1, dout, f32))               # added post-accumulate (f32)
        relu_flags.append(relu)

    return {"weights": tuple(weights), "biases": tuple(biases),
            "relu": tuple(relu_flags), "E": E, "H": H, "Ep": Ep, "Hp": Hp}


def _choose_tile(batch, tb_req):
    """Batch tile: multiple of 8, MXU-filling when possible, >= 2 grid blocks when
    the batch permits (v7x dual TensorCore), and balanced so the last tile is not
    mostly padding."""
    tb = max(8, _round_up(min(tb_req, batch), 8))
    nblk = max(1, -(-batch // tb))
    if nblk == 1 and batch > 8:
        nblk = 2
    tb = max(8, _round_up(-(-batch // nblk), 8))
    nblk = -(-batch // tb)
    return tb, nblk


def ds_model_forward(u, prepped, *, tb=256):
    """u: (B, E) f32.  prepped: output of prepare_ds_weights (padded/bf16 weights)."""
    B, E = u.shape
    assert E == prepped["E"]
    Ep = prepped["Ep"]
    weights, biases, relu_flags = prepped["weights"], prepped["biases"], prepped["relu"]

    tb, nblk = _choose_tile(B, tb)
    Bp = nblk * tb

    f32 = jnp.float32
    u_p = jnp.pad(u.astype(f32), ((0, Bp - B), (0, Ep - E)))

    wb = []
    for w, b in zip(weights, biases):
        wb += [w, b]

    kernel = functools.partial(_ds_kernel, relu_flags=relu_flags, tb=tb, batch=B)

    # Advisory cost estimate (helps XLA schedule the surrounding reduction).
    matmul_flops = 2 * Bp * sum(int(w.shape[0]) * int(w.shape[1]) for w in weights)
    bytes_accessed = int(u_p.size * 4
                         + sum(int(a.size) * a.dtype.itemsize for a in wb)
                         + nblk * 8 * 128 * 4)
    cost = pl.CostEstimate(flops=int(matmul_flops), transcendentals=int(2 * Bp),
                           bytes_accessed=bytes_accessed)

    # Explicit VMEM budget: weight copies + double-buffered u tile + out slab,
    # x2 + 4 MiB headroom so the same tb is portable to v7x (64 MiB physical).
    weight_bytes = sum(int(a.size) * a.dtype.itemsize for a in wb)
    vmem_bytes = 2 * (weight_bytes + 2 * tb * Ep * 4 + 2 * 8 * 128 * 4) + (4 << 20)
    vmem_bytes = int(min(max(vmem_bytes, 4 << 20), 64 << 20))

    def build(weight_pipeline_mode):
        def pinned(shape):
            # constant index_map -> block stays resident in VMEM across grid steps
            if weight_pipeline_mode is None:
                return pl.BlockSpec(shape, lambda i: (0, 0))
            return pl.BlockSpec(shape, lambda i: (0, 0),
                                pipeline_mode=weight_pipeline_mode)

        in_specs = [pl.BlockSpec((tb, Ep), lambda i: (i, 0))]   # u streams over batch
        for a in wb:
            in_specs.append(pinned(a.shape))

        return pl.pallas_call(
            kernel,
            out_shape=jax.ShapeDtypeStruct((nblk, 8, 128), f32),
            grid=(nblk,),
            in_specs=in_specs,
            out_specs=pl.BlockSpec((1, 8, 128), lambda i: (i, 0, 0)),
            compiler_params=pltpu.CompilerParams(
                dimension_semantics=("parallel",),
                vmem_limit_bytes=vmem_bytes),
            cost_estimate=cost,
        )

    try:
        # Single-buffer the VMEM-resident weights (halves resident weight footprint).
        partials = build(pl.Buffered(1))(u_p, *wb)
    except Exception:
        # Fallback for jax versions without single-buffer pipeline_mode support.
        partials = build(None)(u_p, *wb)

    # reduce per-block partial sums; divide by the TRUE batch size
    return jnp.sum(partials[:, 0, 0]) / B


def init_params(key, embedding_dim, hidden_dim):
    ks = jax.random.split(key, 8)

    def lin(kw, fan_in, fan_out):
        # deterministic small-scale init (synthetic; not a checkpoint load)
        return jax.random.normal(kw, (fan_in, fan_out), jnp.float32) * (1.0 / jnp.sqrt(fan_in))

    return {
        "w1": lin(ks[0], embedding_dim, hidden_dim),
        "b1": jax.random.normal(ks[1], (1, hidden_dim), jnp.float32) * 0.01,
        "w2": lin(ks[2], hidden_dim, embedding_dim),
        "b2": jax.random.normal(ks[3], (1, embedding_dim), jnp.float32) * 0.01,
        "w3": lin(ks[4], embedding_dim, hidden_dim),
        "b3": jax.random.normal(ks[5], (1, hidden_dim), jnp.float32) * 0.01,
        "w4": lin(ks[6], hidden_dim, embedding_dim),
        "b4": jax.random.normal(ks[7], (1, embedding_dim), jnp.float32) * 0.01,
    }


def ds_model_reference(u, p):
    """Unfused pure-JAX f32 reference matching the original PyTorch module."""
    h = jnp.maximum(u @ p["w1"] + p["b1"], 0.0)
    x = h @ p["w2"] + p["b2"]
    h2 = jnp.maximum(x @ p["w3"] + p["b3"], 0.0)
    x2 = h2 @ p["w4"] + p["b4"]
    xn = x2 / jnp.maximum(jnp.linalg.norm(x2, axis=1, keepdims=True), 1e-12)
    return jnp.mean(jnp.linalg.norm(xn - u, axis=1))


if __name__ == "__main__":
    # Scaled-down module dims (embedding_dim=800 -> 200, hidden_dim=400 -> 100);
    # intentionally NOT lane multiples (exercises the padding path), a batch that is
    # not a multiple of the tile (exercises the ragged-row mask), and >= 2 grid
    # blocks (exercises the "parallel" axis / v7x dual-TC split).
    B, E, H = 20, 200, 100

    key = jax.random.PRNGKey(0)
    k_u, k_p = jax.random.split(key)
    u = jax.random.normal(k_u, (B, E), jnp.float32)
    params = init_params(k_p, E, H)

    prepped = prepare_ds_weights(params)      # hoisted: once per weight update
    dist = jax.block_until_ready(ds_model_forward(u, prepped, tb=256))
    ref = jax.block_until_ready(ds_model_reference(u, params))

    # Tolerance reflects the offline W2@W3 fusion and bf16 MXU operands (with f32
    # accumulate); both change rounding order vs the unfused f32 reference.
    assert jnp.allclose(dist, ref, rtol=5e-3, atol=5e-3), (dist, ref)
    print("KERNEL_OK")
</pallas_src>

<mosaic_0001>
module attributes {stable_mosaic.version = 11 : i64} {
  func.func @_ds_kernel(%arg0: i32, %arg1: memref<16x256xf32, #tpu.memory_space<vmem>>, %arg2: memref<256x128xbf16, #tpu.memory_space<vmem>>, %arg3: memref<1x128xf32, #tpu.memory_space<vmem>>, %arg4: memref<128x128xbf16, #tpu.memory_space<vmem>>, %arg5: memref<1x128xf32, #tpu.memory_space<vmem>>, %arg6: memref<128x256xbf16, #tpu.memory_space<vmem>>, %arg7: memref<1x256xf32, #tpu.memory_space<vmem>>, %arg8: memref<1x8x128xf32, #tpu.memory_space<vmem>>) attributes {dimension_semantics = [#tpu.dimension_semantics<parallel>], iteration_bounds = array<i64: 2>, scalar_prefetch = 0 : i64, scratch_operands = 0 : i64, tpu.core_type = #tpu.core_type<tc>, window_params = [{transform_indices = @transform_0, window_bounds = array<i64: 16, 256>}, {pipeline_mode = #tpu.pipeline_mode<synchronous>, transform_indices = @transform_1, window_bounds = array<i64: 256, 128>}, {pipeline_mode = #tpu.pipeline_mode<synchronous>, transform_indices = @transform_2, window_bounds = array<i64: 1, 128>}, {pipeline_mode = #tpu.pipeline_mode<synchronous>, transform_indices = @transform_3, window_bounds = array<i64: 128, 128>}, {pipeline_mode = #tpu.pipeline_mode<synchronous>, transform_indices = @transform_4, window_bounds = array<i64: 1, 128>}, {pipeline_mode = #tpu.pipeline_mode<synchronous>, transform_indices = @transform_5, window_bounds = array<i64: 128, 256>}, {pipeline_mode = #tpu.pipeline_mode<synchronous>, transform_indices = @transform_6, window_bounds = array<i64: 1, 256>}, {transform_indices = @transform_7, window_bounds = array<i64: 1, 8, 128>}]} {
    %c0 = arith.constant 0 : index
    %c0_0 = arith.constant 0 : index
    %0 = vector.load %arg1[%c0, %c0_0] : memref<16x256xf32, #tpu.memory_space<vmem>>, vector<16x256xf32>
    %c0_1 = arith.constant 0 : index
    %c0_2 = arith.constant 0 : index
    %1 = vector.load %arg2[%c0_1, %c0_2] : memref<256x128xbf16, #tpu.memory_space<vmem>>, vector<256x128xbf16>
    %c0_3 = arith.constant 0 : index
    %c0_4 = arith.constant 0 : index
    %2 = vector.load %arg3[%c0_3, %c0_4] : memref<1x128xf32, #tpu.memory_space<vmem>>, vector<1x128xf32>
    %3 = arith.truncf %0 : vector<16x256xf32> to vector<16x256xbf16>
    %cst = arith.constant dense<0.000000e+00> : vector<16x128xf32>
    %4 = tpu.matmul %3, %1, %cst {dimension_numbers = #tpu.dot_dimension_numbers<[1], [0], [0], [1], [0, 0, 1, 1], [], []>} : vector<16x256xbf16>, vector<256x128xbf16>, vector<16x128xf32> -> vector<16x128xf32>
    %5 = vector.broadcast %2 : vector<1x128xf32> to vector<16x128xf32>
    %6 = arith.addf %4, %5 : vector<16x128xf32>
    %cst_5 = arith.constant 0.000000e+00 : f32
    %7 = vector.broadcast %cst_5 : f32 to vector<16x128xf32>
    %8 = arith.maximumf %6, %7 : vector<16x128xf32>
    %c0_6 = arith.constant 0 : index
    %c0_7 = arith.constant 0 : index
    %9 = vector.load %arg4[%c0_6, %c0_7] : memref<128x128xbf16, #tpu.memory_space<vmem>>, vector<128x128xbf16>
    %c0_8 = arith.constant 0 : index
    %c0_9 = arith.constant 0 : index
    %10 = vector.load %arg5[%c0_8, %c0_9] : memref<1x128xf32, #tpu.memory_space<vmem>>, vector<1x128xf32>
    %11 = arith.truncf %8 : vector<16x128xf32> to vector<16x128xbf16>
    %cst_10 = arith.constant dense<0.000000e+00> : vector<16x128xf32>
    %12 = tpu.matmul %11, %9, %cst_10 {dimension_numbers = #tpu.dot_dimension_numbers<[1], [0], [0], [1], [0, 0, 1, 1], [], []>} : vector<16x128xbf16>, vector<128x128xbf16>, vector<16x128xf32> -> vector<16x128xf32>
    %13 = vector.broadcast %10 : vector<1x128xf32> to vector<16x128xf32>
    %14 = arith.addf %12, %13 : vector<16x128xf32>
    %cst_11 = arith.constant 0.000000e+00 : f32
    %15 = vector.broadcast %cst_11 : f32 to vector<16x128xf32>
    %16 = arith.maximumf %14, %15 : vector<16x128xf32>
    %c0_12 = arith.constant 0 : index
    %c0_13 = arith.constant 0 : index
    %17 = vector.load %arg6[%c0_12, %c0_13] : memref<128x256xbf16, #tpu.memory_space<vmem>>, vector<128x256xbf16>
    %c0_14 = arith.constant 0 : index
    %c0_15 = arith.constant 0 : index
    %18 = vector.load %arg7[%c0_14, %c0_15] : memref<1x256xf32, #tpu.memory_space<vmem>>, vector<1x256xf32>
    %19 = arith.truncf %16 : vector<16x128xf32> to vector<16x128xbf16>
    %cst_16 = arith.constant dense<0.000000e+00> : vector<16x256xf32>
    %20 = tpu.matmul %19, %17, %cst_16 {dimension_numbers = #tpu.dot_dimension_numbers<[1], [0], [0], [1], [0, 0, 1, 1], [], []>} : vector<16x128xbf16>, vector<128x256xbf16>, vector<16x256xf32> -> vector<16x256xf32>
    %21 = vector.broadcast %18 : vector<1x256xf32> to vector<16x256xf32>
    %22 = arith.addf %20, %21 : vector<16x256xf32>
    %23 = arith.mulf %22, %22 : vector<16x256xf32>
    %cst_17 = arith.constant dense<0.000000e+00> : vector<16xf32>
    %24 = vector.multi_reduction <add>, %23, %cst_17 [1] : vector<16x256xf32> to vector<16xf32>
    %25 = vector.shape_cast %24 : vector<16xf32> to vector<16x1xf32>
    %cst_18 = arith.constant 1.000000e-24 : f32
    %26 = vector.broadcast %cst_18 : f32 to vector<16x1xf32>
    %27 = arith.maximumf %25, %26 : vector<16x1xf32>
    %28 = math.rsqrt %27 : vector<16x1xf32>
    %29 = vector.broadcast %28 : vector<16x1xf32> to vector<16x256xf32>
    %30 = arith.mulf %22, %29 : vector<16x256xf32>
    %31 = arith.subf %30, %0 : vector<16x256xf32>
    %32 = arith.mulf %31, %31 : vector<16x256xf32>
    %cst_19 = arith.constant dense<0.000000e+00> : vector<16xf32>
    %33 = vector.multi_reduction <add>, %32, %cst_19 [1] : vector<16x256xf32> to vector<16xf32>
    %34 = vector.shape_cast %33 : vector<16xf32> to vector<16x1xf32>
    %35 = math.sqrt %34 : vector<16x1xf32>
    %c16_i32 = arith.constant 16 : i32
    %36 = arith.muli %arg0, %c16_i32 : i32
    %37 = tpu.iota {dimensions = array<i32: 0>} : vector<16x1xi32>
    %38 = vector.broadcast %36 : i32 to vector<16x1xi32>
    %39 = arith.addi %38, %37 : vector<16x1xi32>
    %c20_i32 = arith.constant 20 : i32
    %40 = vector.broadcast %c20_i32 : i32 to vector<16x1xi32>
    %41 = arith.cmpi slt, %39, %40 : vector<16x1xi32>
    %42 = arith.extui %41 : vector<16x1xi1> to vector<16x1xi32>
    %43 = arith.sitofp %42 : vector<16x1xi32> to vector<16x1xf32>
    %44 = arith.mulf %35, %43 : vector<16x1xf32>
    %45 = vector.shape_cast %44 : vector<16x1xf32> to vector<1x16x1xf32>
    %cst_20 = arith.constant dense<0.000000e+00> : vector<1xf32>
    %46 = vector.multi_reduction <add>, %45, %cst_20 [1, 2] : vector<1x16x1xf32> to vector<1xf32>
    %47 = vector.shape_cast %46 : vector<1xf32> to vector<1x1x1xf32>
    %48 = vector.extract %47[0, 0, 0] : f32 from vector<1x1x1xf32>
    %49 = vector.broadcast %48 : f32 to vector<1x8x128xf32>
    %c0_21 = arith.constant 0 : index
    %c0_22 = arith.constant 0 : index
    %c0_23 = arith.constant 0 : index
    %50 = vector.load %arg8[%c0_21, %c0_22, %c0_23] : memref<1x8x128xf32, #tpu.memory_space<vmem>>, vector<1x8x128xf32>
    tpu.vector_store %arg8[%c0_21, %c0_22, %c0_23], %49 {strides = array<i32>} : memref<1x8x128xf32, #tpu.memory_space<vmem>>, vector<1x8x128xf32>,
    return
  }
  func.func @transform_0(%arg0: i32) -> (i32, i32) {
    %c0_i32 = arith.constant 0 : i32
    %c0_i32_0 = arith.constant 0 : i32
    return %arg0, %c0_i32 : i32, i32
  }
  func.func @transform_1(%arg0: i32) -> (i32, i32) {
    %c0_i32 = arith.constant 0 : i32
    %c0_i32_0 = arith.constant 0 : i32
    %c0_i32_1 = arith.constant 0 : i32
    return %c0_i32, %c0_i32_0 : i32, i32
  }
  func.func @transform_2(%arg0: i32) -> (i32, i32) {
    %c0_i32 = arith.constant 0 : i32
    %c0_i32_0 = arith.constant 0 : i32
    %c0_i32_1 = arith.constant 0 : i32
    return %c0_i32, %c0_i32_0 : i32, i32
  }
  func.func @transform_3(%arg0: i32) -> (i32, i32) {
    %c0_i32 = arith.constant 0 : i32
    %c0_i32_0 = arith.constant 0 : i32
    %c0_i32_1 = arith.constant 0 : i32
    return %c0_i32, %c0_i32_0 : i32, i32
  }
  func.func @transform_4(%arg0: i32) -> (i32, i32) {
    %c0_i32 = arith.constant 0 : i32
    %c0_i32_0 = arith.constant 0 : i32
    %c0_i32_1 = arith.constant 0 : i32
    return %c0_i32, %c0_i32_0 : i32, i32
  }
  func.func @transform_5(%arg0: i32) -> (i32, i32) {
    %c0_i32 = arith.constant 0 : i32
    %c0_i32_0 = arith.constant 0 : i32
    %c0_i32_1 = arith.constant 0 : i32
    return %c0_i32, %c0_i32_0 : i32, i32
  }
  func.func @transform_6(%arg0: i32) -> (i32, i32) {
    %c0_i32 = arith.constant 0 : i32
    %c0_i32_0 = arith.constant 0 : i32
    %c0_i32_1 = arith.constant 0 : i32
    return %c0_i32, %c0_i32_0 : i32, i32
  }
  func.func @transform_7(%arg0: i32) -> (i32, i32, i32) {
    %c0_i32 = arith.constant 0 : i32
    %c0_i32_0 = arith.constant 0 : i32
    %c0_i32_1 = arith.constant 0 : i32
    return %arg0, %c0_i32, %c0_i32_0 : i32, i32, i32
  }
}

module attributes {stable_mosaic.version = 11 : i64} {
  func.func @_ds_kernel(%arg0: i32, %arg1: memref<16x256xf32, #tpu.memory_space<vmem>>, %arg2: memref<256x128xbf16, #tpu.memory_space<vmem>>, %arg3: memref<1x128xf32, #tpu.memory_space<vmem>>, %arg4: memref<128x128xbf16, #tpu.memory_space<vmem>>, %arg5: memref<1x128xf32, #tpu.memory_space<vmem>>, %arg6: memref<128x256xbf16, #tpu.memory_space<vmem>>, %arg7: memref<1x256xf32, #tpu.memory_space<vmem>>, %arg8: memref<1x8x128xf32, #tpu.memory_space<vmem>>) attributes {dimension_semantics = [#tpu.dimension_semantics<parallel>], iteration_bounds = array<i64: 2>, scalar_prefetch = 0 : i64, scratch_operands = 0 : i64, tpu.core_type = #tpu.core_type<tc>, window_params = [{transform_indices = @transform_0, window_bounds = array<i64: 16, 256>}, {pipeline_mode = #tpu.pipeline_mode<synchronous>, transform_indices = @transform_1, window_bounds = array<i64: 256, 128>}, {pipeline_mode = #tpu.pipeline_mode<synchronous>, transform_indices = @transform_2, window_bounds = array<i64: 1, 128>}, {pipeline_mode = #tpu.pipeline_mode<synchronous>, transform_indices = @transform_3, window_bounds = array<i64: 128, 128>}, {pipeline_mode = #tpu.pipeline_mode<synchronous>, transform_indices = @transform_4, window_bounds = array<i64: 1, 128>}, {pipeline_mode = #tpu.pipeline_mode<synchronous>, transform_indices = @transform_5, window_bounds = array<i64: 128, 256>}, {pipeline_mode = #tpu.pipeline_mode<synchronous>, transform_indices = @transform_6, window_bounds = array<i64: 1, 256>}, {transform_indices = @transform_7, window_bounds = array<i64: 1, 8, 128>}]} {
    %c0 = arith.constant 0 : index
    %c0_0 = arith.constant 0 : index
    %0 = vector.load %arg1[%c0, %c0_0] : memref<16x256xf32, #tpu.memory_space<vmem>>, vector<16x256xf32>
    %c0_1 = arith.constant 0 : index
    %c0_2 = arith.constant 0 : index
    %1 = vector.load %arg2[%c0_1, %c0_2] : memref<256x128xbf16, #tpu.memory_space<vmem>>, vector<256x128xbf16>
    %c0_3 = arith.constant 0 : index
    %c0_4 = arith.constant 0 : index
    %2 = vector.load %arg3[%c0_3, %c0_4] : memref<1x128xf32, #tpu.memory_space<vmem>>, vector<1x128xf32>
    %3 = arith.truncf %0 : vector<16x256xf32> to vector<16x256xbf16>
    %cst = arith.constant dense<0.000000e+00> : vector<16x128xf32>
    %4 = tpu.matmul %3, %1, %cst {dimension_numbers = #tpu.dot_dimension_numbers<[1], [0], [0], [1], [0, 0, 1, 1], [], []>} : vector<16x256xbf16>, vector<256x128xbf16>, vector<16x128xf32> -> vector<16x128xf32>
    %5 = vector.broadcast %2 : vector<1x128xf32> to vector<16x128xf32>
    %6 = arith.addf %4, %5 : vector<16x128xf32>
    %cst_5 = arith.constant 0.000000e+00 : f32
    %7 = vector.broadcast %cst_5 : f32 to vector<16x128xf32>
    %8 = arith.maximumf %6, %7 : vector<16x128xf32>
    %c0_6 = arith.constant 0 : index
    %c0_7 = arith.constant 0 : index
    %9 = vector.load %arg4[%c0_6, %c0_7] : memref<128x128xbf16, #tpu.memory_space<vmem>>, vector<128x128xbf16>
    %c0_8 = arith.constant 0 : index
    %c0_9 = arith.constant 0 : index
    %10 = vector.load %arg5[%c0_8, %c0_9] : memref<1x128xf32, #tpu.memory_space<vmem>>, vector<1x128xf32>
    %11 = arith.truncf %8 : vector<16x128xf32> to vector<16x128xbf16>
    %cst_10 = arith.constant dense<0.000000e+00> : vector<16x128xf32>
    %12 = tpu.matmul %11, %9, %cst_10 {dimension_numbers = #tpu.dot_dimension_numbers<[1], [0], [0], [1], [0, 0, 1, 1], [], []>} : vector<16x128xbf16>, vector<128x128xbf16>, vector<16x128xf32> -> vector<16x128xf32>
    %13 = vector.broadcast %10 : vector<1x128xf32> to vector<16x128xf32>
    %14 = arith.addf %12, %13 : vector<16x128xf32>
    %cst_11 = arith.constant 0.000000e+00 : f32
    %15 = vector.broadcast %cst_11 : f32 to vector<16x128xf32>
    %16 = arith.maximumf %14, %15 : vector<16x128xf32>
    %c0_12 = arith.constant 0 : index
    %c0_13 = arith.constant 0 : index
    %17 = vector.load %arg6[%c0_12, %c0_13] : memref<128x256xbf16, #tpu.memory_space<vmem>>, vector<128x256xbf16>
    %c0_14 = arith.constant 0 : index
    %c0_15 = arith.constant 0 : index
    %18 = vector.load %arg7[%c0_14, %c0_15] : memref<1x256xf32, #tpu.memory_space<vmem>>, vector<1x256xf32>
    %19 = arith.truncf %16 : vector<16x128xf32> to vector<16x128xbf16>
    %cst_16 = arith.constant dense<0.000000e+00> : vector<16x256xf32>
    %20 = tpu.matmul %19, %17, %cst_16 {dimension_numbers = #tpu.dot_dimension_numbers<[1], [0], [0], [1], [0, 0, 1, 1], [], []>} : vector<16x128xbf16>, vector<128x256xbf16>, vector<16x256xf32> -> vector<16x256xf32>
    %21 = vector.broadcast %18 : vector<1x256xf32> to vector<16x256xf32>
    %22 = arith.addf %20, %21 : vector<16x256xf32>
    %23 = arith.mulf %22, %22 : vector<16x256xf32>
    %cst_17 = arith.constant dense<0.000000e+00> : vector<16xf32>
    %24 = vector.multi_reduction <add>, %23, %cst_17 [1] : vector<16x256xf32> to vector<16xf32>
    %25 = vector.shape_cast %24 : vector<16xf32> to vector<16x1xf32>
    %cst_18 = arith.constant 1.000000e-24 : f32
    %26 = vector.broadcast %cst_18 : f32 to vector<16x1xf32>
    %27 = arith.maximumf %25, %26 : vector<16x1xf32>
    %28 = math.rsqrt %27 : vector<16x1xf32>
    %29 = vector.broadcast %28 : vector<16x1xf32> to vector<16x256xf32>
    %30 = arith.mulf %22, %29 : vector<16x256xf32>
    %31 = arith.subf %30, %0 : vector<16x256xf32>
    %32 = arith.mulf %31, %31 : vector<16x256xf32>
    %cst_19 = arith.constant dense<0.000000e+00> : vector<16xf32>
    %33 = vector.multi_reduction <add>, %32, %cst_19 [1] : vector<16x256xf32> to vector<16xf32>
    %34 = vector.shape_cast %33 : vector<16xf32> to vector<16x1xf32>
    %35 = math.sqrt %34 : vector<16x1xf32>
    %c16_i32 = arith.constant 16 : i32
    %36 = arith.muli %arg0, %c16_i32 : i32
    %37 = tpu.iota {dimensions = array<i32: 0>} : vector<16x1xi32>
    %38 = vector.broadcast %36 : i32 to vector<16x1xi32>
    %39 = arith.addi %38, %37 : vector<16x1xi32>
    %c20_i32 = arith.constant 20 : i32
    %40 = vector.broadcast %c20_i32 : i32 to vector<16x1xi32>
    %41 = arith.cmpi slt, %39, %40 : vector<16x1xi32>
    %42 = arith.extui %41 : vector<16x1xi1> to vector<16x1xi32>
    %43 = arith.sitofp %42 : vector<16x1xi32> to vector<16x1xf32>
    %44 = arith.mulf %35, %43 : vector<16x1xf32>
    %45 = vector.shape_cast %44 : vector<16x1xf32> to vector<1x16x1xf32>
    %cst_20 = arith.constant dense<0.000000e+00> : vector<1xf32>
    %46 = vector.multi_reduction <add>, %45, %cst_20 [1, 2] : vector<1x16x1xf32> to vector<1xf32>
    %47 = vector.shape_cast %46 : vector<1xf32> to vector<1x1x1xf32>
    %48 = vector.extract %47[0, 0, 0] : f32 from vector<1x1x1xf32>
    %49 = vector.broadcast %48 : f32 to vector<1x8x128xf32>
    %c0_21 = arith.constant 0 : index
    %c0_22 = arith.constant 0 : index
    %c0_23 = arith.constant 0 : index
    %50 = vector.load %arg8[%c0_21, %c0_22, %c0_23] : memref<1x8x128xf32, #tpu.memory_space<vmem>>, vector<1x8x128xf32>
    tpu.vector_store %arg8[%c0_21, %c0_22, %c0_23], %49 {strides = array<i32>} : memref<1x8x128xf32, #tpu.memory_space<vmem>>, vector<1x8x128xf32>,
    return
  }
  func.func @transform_0(%arg0: i32) -> (i32, i32) {
    %c0_i32 = arith.constant 0 : i32
    %c0_i32_0 = arith.constant 0 : i32
    return %arg0, %c0_i32 : i32, i32
  }
  func.func @transform_1(%arg0: i32) -> (i32, i32) {
    %c0_i32 = arith.constant 0 : i32
    %c0_i32_0 = arith.constant 0 : i32
    %c0_i32_1 = arith.constant 0 : i32
    return %c0_i32, %c0_i32_0 : i32, i32
  }
  func.func @transform_2(%arg0: i32) -> (i32, i32) {
    %c0_i32 = arith.constant 0 : i32
    %c0_i32_0 = arith.constant 0 : i32
    %c0_i32_1 = arith.constant 0 : i32
    return %c0_i32, %c0_i32_0 : i32, i32
  }
  func.func @transform_3(%arg0: i32) -> (i32, i32) {
    %c0_i32 = arith.constant 0 : i32
    %c0_i32_0 = arith.constant 0 : i32
    %c0_i32_1 = arith.constant 0 : i32
    return %c0_i32, %c0_i32_0 : i32, i32
  }
  func.func @transform_4(%arg0: i32) -> (i32, i32) {
    %c0_i32 = arith.constant 0 : i32
    %c0_i32_0 = arith.constant 0 : i32
    %c0_i32_1 = arith.constant 0 : i32
    return %c0_i32, %c0_i32_0 : i32, i32
  }
  func.func @transform_5(%arg0: i32) -> (i32, i32) {
    %c0_i32 = arith.constant 0 : i32
    %c0_i32_0 = arith.constant 0 : i32
    %c0_i32_1 = arith.constant 0 : i32
    return %c0_i32, %c0_i32_0 : i32, i32
  }
  func.func @transform_6(%arg0: i32) -> (i32, i32) {
    %c0_i32 = arith.constant 0 : i32
    %c0_i32_0 = arith.constant 0 : i32
    %c0_i32_1 = arith.constant 0 : i32
    return %c0_i32, %c0_i32_0 : i32, i32
  }
  func.func @transform_7(%arg0: i32) -> (i32, i32, i32) {
    %c0_i32 = arith.constant 0 : i32
    %c0_i32_0 = arith.constant 0 : i32
    %c0_i32_1 = arith.constant 0 : i32
    return %arg0, %c0_i32, %c0_i32_0 : i32, i32, i32
  }
}

</mosaic_0001>

<llo_original>
// kernel: tpu_custom_call.1
$region0: #{tpu_custom_call.1}
  #allocation0 [shape = 'u32[]', space=smem, size = 0x4, offset = 0x4, fixed_abs, tag = 'smem constant byte address 0x4 - core index']
  #allocation1 [shape = 'u32[144,128]{1,0:T(1,128)}', space=vmem, size = 0x12000, scoped, tag = 'internal scratch']
  %s0 = inlined_call_operand.hbm [shape: f32[32,256], index: 0, kind: input, shape index: {}]
  %s1 = inlined_call_operand.hbm [shape: bf16[256,128], index: 1, kind: input, shape index: {}]
  %s2 = inlined_call_operand.vmem [shape: f32[1,128], index: 2, kind: input, shape index: {}]
  %s3 = inlined_call_operand.hbm [shape: bf16[128,128], index: 3, kind: input, shape index: {}]
  %s4 = inlined_call_operand.vmem [shape: f32[1,128], index: 4, kind: input, shape index: {}]
  %s5 = inlined_call_operand.hbm [shape: bf16[128,256], index: 5, kind: input, shape index: {}]
  %s6 = inlined_call_operand.vmem [shape: f32[1,256], index: 6, kind: input, shape index: {}]
  %s7 = inlined_call_operand.hbm [shape: f32[2,8,128], index: 7, kind: output, shape index: {}]
  %s8 = sld [smem:[#allocation0]]
  $region77: #{tpu_custom_call.1} parent=0
    _
  %s10 = ssub.s32 1, %s8
  %s11 = scalar_select 0, %s10, %s8
  $region1: #{tpu_custom_call.1} parent=0
    #allocation2 [shape = 'u8[32768]{0}', space=vmem, size = 0x8000, scoped, tag = 'input window, operand 0']
    #allocation3 [shape = 's32[2]{0}', space=sflag, size = 0x8, scoped, tag = 'scoped memory for tpu_custom_call.1']
    #allocation4 [shape = 's32[2]{0}', space=sflag, size = 0x8, scoped, tag = 'scoped memory for tpu_custom_call.1']
    #allocation5 [shape = 'u8[65536]{0}', space=vmem, size = 0x10000, scoped, tag = 'input window, operand 1, single buffered']
    #allocation6 [shape = 's32[1]{0}', space=sflag, size = 0x4, scoped, tag = 'scoped memory for tpu_custom_call.1']
    #allocation7 [shape = 'u8[32768]{0}', space=vmem, size = 0x8000, scoped, tag = 'input window, operand 3, single buffered']
    #allocation8 [shape = 'u8[65536]{0}', space=vmem, size = 0x10000, scoped, tag = 'input window, operand 5, single buffered']
    #allocation9 [shape = 's32[1]{0}', space=sflag, size = 0x4, scoped, tag = 'scoped memory for tpu_custom_call.1']
    #allocation10 [shape = 'u8[8192]{0}', space=vmem, size = 0x2000, scoped, tag = 'output window, operand 0']
    %12 = vsyncpa [#allocation3], 0
    %s13 = scalar_lea.sflag [#allocation3], 1
    %14 = vsyncpa %s13, 0
    %15 = vsyncpa [#allocation6], 0
    %16 = vsyncpa [#allocation9], 0
    %17 = vsyncpa [#allocation4], 0
    %s18 = scalar_lea.sflag [#allocation4], 1
    %19 = vsyncpa %s18, 0
    loop: start=0, step=1, limit=4
    $region2: #{tpu_custom_call.1} parent=1 // loop_pre_header
      _
    $region3: #{tpu_custom_call.1} parent=1 // loop_header
      %s21 = sphi 0, %s25
      %p22 = scmp.ge.s32.totalorder %s21, 4
      %s31 = sphi 0, %s33
      %s34 = sphi 0, %s31
      %s35 = sphi 0, %s34
      %s51 = sphi 0, %s35
      %s55 = sphi 0, %s55
      %s57 = sphi 0, %s55
      %s58 = sphi 0, %s57
      %s72 = sphi 0, %s58
      %s76 = sphi 0, %s76
      %s78 = sphi 0, %s76
      %s79 = sphi 0, %s78
      %s93 = sphi 0, %s79
      %s97 = sphi 0, %s97
      %s99 = sphi 0, %s97
      %s100 = sphi 0, %s99
      %s114 = sphi 0, %s100
      %s118 = sphi 0, %s118
      %s120 = sphi 0, %s118
      %s121 = sphi 0, %s120
      %s135 = sphi 0, %s121
      %s139 = sphi 0, %s139
      %s141 = sphi 0, %s139
      %s142 = sphi 0, %s141
      %s156 = sphi 0, %s142
      %s160 = sphi 0, %s160
      %s162 = sphi 0, %s160
      %s163 = sphi 0, %s162
      %s177 = sphi 0, %s163
      %s183 = sphi 0, %s185
      %s186 = sphi 0, %s183
      %s187 = sphi 0, %s186
      %s203 = sphi 0, %s187
    $region4: #{tpu_custom_call.1} parent=1 // loop_header_branch
      %24 = sbr.rel (%p22) target = $region8
    $region5: #{tpu_custom_call.1} parent=1 // loop_body
      %s26 = ssub.s32 %s21, 1
      %s27 = ssub.s32 %s21, 2
      %s28 = sadd.s32 %s21, 1
      %s29 = ssub.s32 %s21, %s28
      %p30 = scmp.eq.s32.totalorder %s29, 0
      %s32 = sadd.s32 %s31, 1
      %s33 = scalar_select %p30, %s31, %s32
      %p36 = pneg %p30
      %p37 = scmp.eq.s32.totalorder %s21, 1
      %p38 = por %p36, %p37
      %p39 = scmp.ne.s32.totalorder %s31, %s34
      %p40 = scmp.eq.s32.totalorder %s21, 0
      %p41 = por %p39, %p40
      %p42 = scmp.ne.s32.totalorder %s31, %s34
      %p43 = scmp.eq.s32.totalorder %s26, 1
      %p44 = por %p42, %p43
      %p45 = scmp.ne.s32.totalorder %s34, %s35
      %p46 = scmp.eq.s32.totalorder %s26, 0
      %p47 = por %p45, %p46
      %p48 = scmp.ne.s32.totalorder %s34, %s35
      %p49 = scmp.eq.s32.totalorder %s27, 1
      %p50 = por %p48, %p49
      %p52 = scmp.ne.s32.totalorder %s35, %s51
      %p53 = scmp.eq.s32.totalorder %s27, 0
      %p54 = por %p52, %p53
      %s56 = sadd.s32 %s55, 1
      %p59 = scmp.eq.s32.totalorder %s21, 1
      %p60 = scmp.ne.s32.totalorder %s55, %s57
      %p61 = scmp.eq.s32.totalorder %s21, 0
      %p62 = por %p60, %p61
      %p63 = scmp.ne.s32.totalorder %s55, %s57
      %p64 = scmp.eq.s32.totalorder %s26, 1
      %p65 = por %p63, %p64
      %p66 = scmp.ne.s32.totalorder %s57, %s58
      %p67 = scmp.eq.s32.totalorder %s26, 0
      %p68 = por %p66, %p67
      %p69 = scmp.ne.s32.totalorder %s57, %s58
      %p70 = scmp.eq.s32.totalorder %s27, 1
      %p71 = por %p69, %p70
      %p73 = scmp.ne.s32.totalorder %s58, %s72
      %p74 = scmp.eq.s32.totalorder %s27, 0
      %p75 = por %p73, %p74
      %s77 = sadd.s32 %s76, 1
      %p80 = scmp.eq.s32.totalorder %s21, 1
      %p81 = scmp.ne.s32.totalorder %s76, %s78
      %p82 = scmp.eq.s32.totalorder %s21, 0
      %p83 = por %p81, %p82
      %p84 = scmp.ne.s32.totalorder %s76, %s78
      %p85 = scmp.eq.s32.totalorder %s26, 1
      %p86 = por %p84, %p85
      %p87 = scmp.ne.s32.totalorder %s78, %s79
      %p88 = scmp.eq.s32.totalorder %s26, 0
      %p89 = por %p87, %p88
      %p90 = scmp.ne.s32.totalorder %s78, %s79
      %p91 = scmp.eq.s32.totalorder %s27, 1
      %p92 = por %p90, %p91
      %p94 = scmp.ne.s32.totalorder %s79, %s93
      %p95 = scmp.eq.s32.totalorder %s27, 0
      %p96 = por %p94, %p95
      %s98 = sadd.s32 %s97, 1
      %p101 = scmp.eq.s32.totalorder %s21, 1
      %p102 = scmp.ne.s32.totalorder %s97, %s99
      %p103 = scmp.eq.s32.totalorder %s21, 0
      %p104 = por %p102, %p103
      %p105 = scmp.ne.s32.totalorder %s97, %s99
      %p106 = scmp.eq.s32.totalorder %s26, 1
      %p107 = por %p105, %p106
      %p108 = scmp.ne.s32.totalorder %s99, %s100
      %p109 = scmp.eq.s32.totalorder %s26, 0
      %p110 = por %p108, %p109
      %p111 = scmp.ne.s32.totalorder %s99, %s100
      %p112 = scmp.eq.s32.totalorder %s27, 1
      %p113 = por %p111, %p112
      %p115 = scmp.ne.s32.totalorder %s100, %s114
      %p116 = scmp.eq.s32.totalorder %s27, 0
      %p117 = por %p115, %p116
      %s119 = sadd.s32 %s118, 1
      %p122 = scmp.eq.s32.totalorder %s21, 1
      %p123 = scmp.ne.s32.totalorder %s118, %s120
      %p124 = scmp.eq.s32.totalorder %s21, 0
      %p125 = por %p123, %p124
      %p126 = scmp.ne.s32.totalorder %s118, %s120
      %p127 = scmp.eq.s32.totalorder %s26, 1
      %p128 = por %p126, %p127
      %p129 = scmp.ne.s32.totalorder %s120, %s121
      %p130 = scmp.eq.s32.totalorder %s26, 0
      %p131 = por %p129, %p130
      %p132 = scmp.ne.s32.totalorder %s120, %s121
      %p133 = scmp.eq.s32.totalorder %s27, 1
      %p134 = por %p132, %p133
      %p136 = scmp.ne.s32.totalorder %s121, %s135
      %p137 = scmp.eq.s32.totalorder %s27, 0
      %p138 = por %p136, %p137
      %s140 = sadd.s32 %s139, 1
      %p143 = scmp.eq.s32.totalorder %s21, 1
      %p144 = scmp.ne.s32.totalorder %s139, %s141
      %p145 = scmp.eq.s32.totalorder %s21, 0
      %p146 = por %p144, %p145
      %p147 = scmp.ne.s32.totalorder %s139, %s141
      %p148 = scmp.eq.s32.totalorder %s26, 1
      %p149 = por %p147, %p148
      %p150 = scmp.ne.s32.totalorder %s141, %s142
      %p151 = scmp.eq.s32.totalorder %s26, 0
      %p152 = por %p150, %p151
      %p153 = scmp.ne.s32.totalorder %s141, %s142
      %p154 = scmp.eq.s32.totalorder %s27, 1
      %p155 = por %p153, %p154
      %p157 = scmp.ne.s32.totalorder %s142, %s156
      %p158 = scmp.eq.s32.totalorder %s27, 0
      %p159 = por %p157, %p158
      %s161 = sadd.s32 %s160, 1
      %p164 = scmp.eq.s32.totalorder %s21, 1
      %p165 = scmp.ne.s32.totalorder %s160, %s162
      %p166 = scmp.eq.s32.totalorder %s21, 0
      %p167 = por %p165, %p166
      %p168 = scmp.ne.s32.totalorder %s160, %s162
      %p169 = scmp.eq.s32.totalorder %s26, 1
      %p170 = por %p168, %p169
      %p171 = scmp.ne.s32.totalorder %s162, %s163
      %p172 = scmp.eq.s32.totalorder %s26, 0
      %p173 = por %p171, %p172
      %p174 = scmp.ne.s32.totalorder %s162, %s163
      %p175 = scmp.eq.s32.totalorder %s27, 1
      %p176 = por %p174, %p175
      %p178 = scmp.ne.s32.totalorder %s163, %s177
      %p179 = scmp.eq.s32.totalorder %s27, 0
      %p180 = por %p178, %p179
      %s181 = ssub.s32 %s21, %s28
      %p182 = scmp.eq.s32.totalorder %s181, 0
      %s184 = sadd.s32 %s183, 1
      %s185 = scalar_select %p182, %s183, %s184
      %p188 = pneg %p182
      %p189 = scmp.eq.s32.totalorder %s21, 1
      %p190 = por %p188, %p189
      %p191 = scmp.ne.s32.totalorder %s183, %s186
      %p192 = scmp.eq.s32.totalorder %s21, 0
      %p193 = por %p191, %p192
      %p194 = scmp.ne.s32.totalorder %s183, %s186
      %p195 = scmp.eq.s32.totalorder %s26, 1
      %p196 = por %p194, %p195
      %p197 = scmp.ne.s32.totalorder %s186, %s187
      %p198 = scmp.eq.s32.totalorder %s26, 0
      %p199 = por %p197, %p198
      %p200 = scmp.ne.s32.totalorder %s186, %s187
      %p201 = scmp.eq.s32.totalorder %s27, 1
      %p202 = por %p200, %p201
      %p204 = scmp.ne.s32.totalorder %s187, %s203
      %p205 = scmp.eq.s32.totalorder %s27, 0
      %p206 = por %p204, %p205
      %p207 = scmp.le.s32.totalorder 1, %s21
      %p208 = scmp.lt.s32.totalorder %s21, 3
      %p209 = pnand %p207, %p208
      %p210 = pneg %p209
      // Predicated region
      $region9: #{tpu_custom_call.1} parent=5 // pred_check
        _
      $region10: #{tpu_custom_call.1} parent=5 // pred_check_branch
        %212 = sbr.rel (%p209) target = $region12
      $region11: #{tpu_custom_call.1} parent=5 // pred_region
        %s213 = ssub.s32 %s21, 1
        // Predicated region
        $region13: #{tpu_custom_call.1} parent=11 // pred_check
          %p214 = pneg %p68
        $region14: #{tpu_custom_call.1} parent=11 // pred_check_branch
          %216 = sbr.rel (%p214) target = $region16
        $region15: #{tpu_custom_call.1} parent=11 // pred_region
          %s218 = ssub.s32 2048, 2048
          %219 = vsyncadd [#allocation6], %s218
          %s220 = sshll.u32 [#allocation5], 4
          %s221 = int_to_ptr.vmem [resolvable:$true] %s220
          %226 = dma.hbm_to_vmem [thread:$0]  %s1, 2048, %s221, [#allocation6], 64, 64, 4
        $region16: #{tpu_custom_call.1} parent=11 // pred_fallthru
          _
        // Predicated region
        $region17: #{tpu_custom_call.1} parent=11 // pred_check
          %p227 = pneg %p89
        $region18: #{tpu_custom_call.1} parent=11 // pred_check_branch
          %229 = sbr.rel (%p227) target = $region20
        $region19: #{tpu_custom_call.1} parent=11 // pred_region
          _
        $region20: #{tpu_custom_call.1} parent=11 // pred_fallthru
          _
        // Predicated region
        $region21: #{tpu_custom_call.1} parent=11 // pred_check
          %p230 = pneg %p110
        $region22: #{tpu_custom_call.1} parent=11 // pred_check_branch
          %232 = sbr.rel (%p230) target = $region24
        $region23: #{tpu_custom_call.1} parent=11 // pred_region
          %s234 = ssub.s32 1024, 1024
          %235 = vsyncadd [#allocation6], %s234
          %s236 = sshll.u32 [#allocation7], 4
          %s237 = int_to_ptr.vmem [resolvable:$true] %s236
          %242 = dma.hbm_to_vmem [thread:$0]  %s3, 1024, %s237, [#allocation6], 64, 64, 4
        $region24: #{tpu_custom_call.1} parent=11 // pred_fallthru
          _
        // Predicated region
        $region25: #{tpu_custom_call.1} parent=11 // pred_check
          %p243 = pneg %p131
        $region26: #{tpu_custom_call.1} parent=11 // pred_check_branch
          %245 = sbr.rel (%p243) target = $region28
        $region27: #{tpu_custom_call.1} parent=11 // pred_region
          _
        $region28: #{tpu_custom_call.1} parent=11 // pred_fallthru
          _
        // Predicated region
        $region29: #{tpu_custom_call.1} parent=11 // pred_check
          %p246 = pneg %p152
        $region30: #{tpu_custom_call.1} parent=11 // pred_check_branch
          %248 = sbr.rel (%p246) target = $region32
        $region31: #{tpu_custom_call.1} parent=11 // pred_region
          %s250 = ssub.s32 2048, 2048
          %251 = vsyncadd [#allocation9], %s250
          %s252 = sshll.u32 [#allocation8], 4
          %s253 = int_to_ptr.vmem [resolvable:$true] %s252
          %258 = dma.hbm_to_vmem [thread:$0]  %s5, 2048, %s253, [#allocation9], 128, 128, 8
        $region32: #{tpu_custom_call.1} parent=11 // pred_fallthru
          _
        // Predicated region
        $region33: #{tpu_custom_call.1} parent=11 // pred_check
          %p259 = pneg %p173
        $region34: #{tpu_custom_call.1} parent=11 // pred_check_branch
          %261 = sbr.rel (%p259) target = $region36
        $region35: #{tpu_custom_call.1} parent=11 // pred_region
          _
        $region36: #{tpu_custom_call.1} parent=11 // pred_fallthru
          _
      $region12: #{tpu_custom_call.1} parent=5 // pred_fallthru
        _
      %p262 = scmp.lt.s32.totalorder %s21, 2
      // Predicated region
      $region37: #{tpu_custom_call.1} parent=5 // pred_check
        %p263 = pneg %p262
      $region38: #{tpu_custom_call.1} parent=5 // pred_check_branch
        %265 = sbr.rel (%p263) target = $region40
      $region39: #{tpu_custom_call.1} parent=5 // pred_region
        // Predicated region
        $region41: #{tpu_custom_call.1} parent=39 // pred_check
          %p266 = pneg %p41
        $region42: #{tpu_custom_call.1} parent=39 // pred_check_branch
          %268 = sbr.rel (%p266) target = $region44
        $region43: #{tpu_custom_call.1} parent=39 // pred_region
          %s269 = sand.u32 %s31, 1
          %s270 = scalar_lea.sflag [#allocation3], %s269
          %s271 = sand.u32 %s31, 1
          %s272 = smul.addr %s271, 32
          %s273 = scalar_lea.vmem [#allocation2], %s272
          %s274 = smul.u32 2, %s21
          %s276 = ssub.s32 512, 512
          %277 = vsyncadd %s270, %s276
          %s278 = smul.addr %s274, 2
          %s279 = smul.addr %s278, 128
          %s280 = scalar_lea.hbm %s0, %s279
          %s281 = sshll.u32 %s273, 4
          %s282 = int_to_ptr.vmem [resolvable:$true] %s281
          %287 = dma.hbm_to_vmem [thread:$0]  %s280, 512, %s282, %s270, 256, 256, 16
        $region44: #{tpu_custom_call.1} parent=39 // pred_fallthru
          _
      $region40: #{tpu_custom_call.1} parent=5 // pred_fallthru
        _
      %p288 = scmp.le.s32.totalorder 1, %s21
      %p289 = scmp.lt.s32.totalorder %s21, 3
      %p290 = pnand %p288, %p289
      %p291 = pneg %p290
      // Predicated region
      $region45: #{tpu_custom_call.1} parent=5 // pred_check
        _
      $region46: #{tpu_custom_call.1} parent=5 // pred_check_branch
        %293 = sbr.rel (%p290) target = $region48
      $region47: #{tpu_custom_call.1} parent=5 // pred_region
        %s294 = ssub.s32 %s21, 1
        %s295 = sand.u32 %s34, 1
        %s296 = scalar_lea.sflag [#allocation3], %s295
        %s297 = sand.u32 %s34, 1
        %s298 = smul.addr %s297, 32
        %s299 = scalar_lea.vmem [#allocation2], %s298
        // Predicated region
        $region49: #{tpu_custom_call.1} parent=47 // pred_check
          %p300 = pneg %p47
        $region50: #{tpu_custom_call.1} parent=47 // pred_check_branch
          %302 = sbr.rel (%p300) target = $region52
        $region51: #{tpu_custom_call.1} parent=47 // pred_region
          %303 = dma.done %s296, 512
        $region52: #{tpu_custom_call.1} parent=47 // pred_fallthru
          _
        // Predicated region
        $region53: #{tpu_custom_call.1} parent=47 // pred_check
          %p304 = pneg %p68
        $region54: #{tpu_custom_call.1} parent=47 // pred_check_branch
          %306 = sbr.rel (%p304) target = $region56
        $region55: #{tpu_custom_call.1} parent=47 // pred_region
          %307 = dma.done [#allocation6], 2048
        $region56: #{tpu_custom_call.1} parent=47 // pred_fallthru
          _
        // Predicated region
        $region57: #{tpu_custom_call.1} parent=47 // pred_check
          %p308 = pneg %p110
        $region58: #{tpu_custom_call.1} parent=47 // pred_check_branch
          %310 = sbr.rel (%p308) target = $region60
        $region59: #{tpu_custom_call.1} parent=47 // pred_region
          %311 = dma.done [#allocation6], 1024
        $region60: #{tpu_custom_call.1} parent=47 // pred_fallthru
          _
        // Predicated region
        $region61: #{tpu_custom_call.1} parent=47 // pred_check
          %p312 = pneg %p152
        $region62: #{tpu_custom_call.1} parent=47 // pred_check_branch
          %314 = sbr.rel (%p312) target = $region64
        $region63: #{tpu_custom_call.1} parent=47 // pred_region
          %315 = dma.done [#allocation9], 2048
        $region64: #{tpu_custom_call.1} parent=47 // pred_fallthru
          _
        %s316 = sand.u32 %s34, 1
        %s317 = scalar_lea.sflag [#allocation3], %s316
        %s318 = sand.u32 %s34, 1
        %s319 = smul.addr %s318, 32
        %s320 = scalar_lea.vmem [#allocation2], %s319
        %p321 = pneg %p47
        %p322 = pneg %p44
        %p323 = pneg %p68
        %p324 = pneg %p65
        %p325 = pneg %p89
        %p326 = pneg %p86
        %p327 = pneg %p110
        %p328 = pneg %p107
        %p329 = pneg %p131
        %p330 = pneg %p128
        %p331 = pneg %p152
        %p332 = pneg %p149
        %p333 = pneg %p173
        %p334 = pneg %p170
        %p335 = pneg %p199
        %p336 = pneg %p196
        %s337 = sand.u32 %s186, 1
        %s338 = scalar_lea.sflag [#allocation4], %s337
        %s339 = sand.u32 %s186, 1
        %s340 = smul.addr %s339, 8
        %s341 = scalar_lea.vmem [#allocation10], %s340
        %s342 = smul.u32 2, %s26
        %v344 = vld [vmem:[%s299] sm:$0xff]
        %v345 = vld [vmem:[%s299 + $0x8] sm:$0xff]
        %v346 = vld [vmem:[%s299 + $0x10] sm:$0xff]
        %v347 = vld [vmem:[%s299 + $0x18] sm:$0xff]
        %v348 = vld [vmem:[#allocation5] sm:$0xf]
        %v349 = vld [vmem:[#allocation5 + $0x4] sm:$0xf]
        %v350 = vld [vmem:[#allocation5 + $0x8] sm:$0xf]
        %v351 = vld [vmem:[#allocation5 + $0xc] sm:$0xf]
        %v352 = vld [vmem:[#allocation5 + $0x10] sm:$0xf]
        %v353 = vld [vmem:[#allocation5 + $0x14] sm:$0xf]
        %v354 = vld [vmem:[#allocation5 + $0x18] sm:$0xf]
        %v355 = vld [vmem:[#allocation5 + $0x1c] sm:$0xf]
        %v356 = vld [vmem:[#allocation5 + $0x20] sm:$0xf]
        %v357 = vld [vmem:[#allocation5 + $0x24] sm:$0xf]
        %v358 = vld [vmem:[#allocation5 + $0x28] sm:$0xf]
        %v359 = vld [vmem:[#allocation5 + $0x2c] sm:$0xf]
        %v360 = vld [vmem:[#allocation5 + $0x30] sm:$0xf]
        %v361 = vld [vmem:[#allocation5 + $0x34] sm:$0xf]
        %v362 = vld [vmem:[#allocation5 + $0x38] sm:$0xf]
        %v363 = vld [vmem:[#allocation5 + $0x3c] sm:$0xf]
        %v364 = vld [vmem:[#allocation5 + $0x40] sm:$0xf]
        %v365 = vld [vmem:[#allocation5 + $0x44] sm:$0xf]
        %v366 = vld [vmem:[#allocation5 + $0x48] sm:$0xf]
        %v367 = vld [vmem:[#allocation5 + $0x4c] sm:$0xf]
        %v368 = vld [vmem:[#allocation5 + $0x50] sm:$0xf]
        %v369 = vld [vmem:[#allocation5 + $0x54] sm:$0xf]
        %v370 = vld [vmem:[#allocation5 + $0x58] sm:$0xf]
        %v371 = vld [vmem:[#allocation5 + $0x5c] sm:$0xf]
        %v372 = vld [vmem:[#allocation5 + $0x60] sm:$0xf]
        %v373 = vld [vmem:[#allocation5 + $0x64] sm:$0xf]
        %v374 = vld [vmem:[#allocation5 + $0x68] sm:$0xf]
        %v375 = vld [vmem:[#allocation5 + $0x6c] sm:$0xf]
        %v376 = vld [vmem:[#allocation5 + $0x70] sm:$0xf]
        %v377 = vld [vmem:[#allocation5 + $0x74] sm:$0xf]
        %v378 = vld [vmem:[#allocation5 + $0x78] sm:$0xf]
        %v379 = vld [vmem:[#allocation5 + $0x7c] sm:$0xf]
        %v380 = vld [vmem:[%s2] sm:$0x1]
        %v381 = vpack.c.bf16 %v346, %v344
        %v382 = vpack.c.bf16 %v347, %v345
        %v384 = vlaneseq
        %v385 = vshrl.u32 %v384, 7
        %v386 = vsub.s32 0, %v385
        %v387 = vrot.slane %v380, %v386
        %v421 = vunpack.c.l.b16 %v348
        %v422 = vunpack.c.l.b16 %v349
        %v423 = vunpack.c.l.b16 %v350
        %v424 = vunpack.c.l.b16 %v351
        %v425 = vunpack.c.l.b16 %v352
        %v426 = vunpack.c.l.b16 %v353
        %v427 = vunpack.c.l.b16 %v354
        %v428 = vunpack.c.l.b16 %v355
        %v429 = vunpack.c.l.b16 %v356
        %v430 = vunpack.c.l.b16 %v357
        %v431 = vunpack.c.l.b16 %v358
        %v432 = vunpack.c.l.b16 %v359
        %v433 = vunpack.c.l.b16 %v360
        %v434 = vunpack.c.l.b16 %v361
        %v435 = vunpack.c.l.b16 %v362
        %v436 = vunpack.c.l.b16 %v363
        %v437 = vunpack.c.l.b16 %v364
        %v438 = vunpack.c.l.b16 %v365
        %v439 = vunpack.c.l.b16 %v366
        %v440 = vunpack.c.l.b16 %v367
        %v441 = vunpack.c.l.b16 %v368
        %v442 = vunpack.c.l.b16 %v369
        %v443 = vunpack.c.l.b16 %v370
        %v444 = vunpack.c.l.b16 %v371
        %v445 = vunpack.c.l.b16 %v372
        %v446 = vunpack.c.l.b16 %v373
        %v447 = vunpack.c.l.b16 %v374
        %v448 = vunpack.c.l.b16 %v375
        %v449 = vunpack.c.l.b16 %v376
        %v450 = vunpack.c.l.b16 %v377
        %v451 = vunpack.c.l.b16 %v378
        %v452 = vunpack.c.l.b16 %v379
        %v453 = vpack.c.b16 %v422, %v421
        %v454 = vpack.c.b16 %v424, %v423
        %v455 = vpack.c.b16 %v426, %v425
        %v456 = vpack.c.b16 %v428, %v427
        %v457 = vpack.c.b16 %v430, %v429
        %v458 = vpack.c.b16 %v432, %v431
        %v459 = vpack.c.b16 %v434, %v433
        %v460 = vpack.c.b16 %v436, %v435
        %v461 = vpack.c.b16 %v438, %v437
        %v462 = vpack.c.b16 %v440, %v439
        %v463 = vpack.c.b16 %v442, %v441
        %v464 = vpack.c.b16 %v444, %v443
        %v465 = vpack.c.b16 %v446, %v445
        %v466 = vpack.c.b16 %v448, %v447
        %v467 = vpack.c.b16 %v450, %v449
        %v468 = vpack.c.b16 %v452, %v451
        %485 = vmatprep.subr.bf16.mxu0 0
        %486 = vmatpush1.bf16.msra.mxu0 %v460
        %487 = vmatprep.subr.bf16.mxu0 0
        %488 = vmatpush1.bf16.msra.mxu0 %v459
        %489 = vmatprep.subr.bf16.mxu0 0
        %490 = vmatpush1.bf16.msra.mxu0 %v458
        %491 = vmatprep.subr.bf16.mxu0 0
        %492 = vmatpush1.bf16.msra.mxu0 %v457
        %493 = vmatprep.subr.bf16.mxu0 0
        %494 = vmatpush1.bf16.msra.mxu0 %v456
        %495 = vmatprep.subr.bf16.mxu0 0
        %496 = vmatpush1.bf16.msra.mxu0 %v455
        %497 = vmatprep.subr.bf16.mxu0 0
        %498 = vmatpush1.bf16.msra.mxu0 %v454
        %499 = vmatprep.subr.bf16.mxu0 0
        %500 = vmatpush1.bf16.msra.mxu0 %v453
        %501 = vmatprep.subr.bf16.mxu0 0
        %502 = vmatpush2.bf16.msra.mxu0 %v468
        %503 = vmatprep.subr.bf16.mxu0 0
        %504 = vmatpush2.bf16.msra.mxu0 %v467
        %505 = vmatprep.subr.bf16.mxu0 0
        %506 = vmatpush2.bf16.msra.mxu0 %v466
        %507 = vmatprep.subr.bf16.mxu0 0
        %508 = vmatpush2.bf16.msra.mxu0 %v465
        %509 = vmatprep.subr.bf16.mxu0 0
        %510 = vmatpush2.bf16.msra.mxu0 %v464
        %511 = vmatprep.subr.bf16.mxu0 0
        %512 = vmatpush2.bf16.msra.mxu0 %v463
        %513 = vmatprep.subr.bf16.mxu0 0
        %514 = vmatpush2.bf16.msra.mxu0 %v462
        %515 = vmatprep.subr.bf16.mxu0 0
        %516 = vmatpush2.bf16.msra.mxu0 %v461
        %517 = vmatprep.mubr.bf16.mxu0 %v382
        %518 = vmatmul.mubr.bf16.gmra.mxu0 %v381
        %v519 = vpop.f32.mrf.mxu0
        %v520 = vadd.f32 %v387, %v519
        %v521 = vpop.f32.mrf.mxu0
        %v522 = vpop.f32.mrf.mxu0
        %v523 = vadd.f32 %v387, %v522
        %v524 = vpop.f32.mrf.mxu0
        %525 = vdwg.mxu0
        %v526 = vmax.f32 %v520, 0.0
        %v527 = vmax.f32 %v523, 0.0
        %v528 = vld [vmem:[#allocation7] sm:$0xf]
        %v529 = vld [vmem:[#allocation7 + $0x4] sm:$0xf]
        %v530 = vld [vmem:[#allocation7 + $0x8] sm:$0xf]
        %v531 = vld [vmem:[#allocation7 + $0xc] sm:$0xf]
        %v532 = vld [vmem:[#allocation7 + $0x10] sm:$0xf]
        %v533 = vld [vmem:[#allocation7 + $0x14] sm:$0xf]
        %v534 = vld [vmem:[#allocation7 + $0x18] sm:$0xf]
        %v535 = vld [vmem:[#allocation7 + $0x1c] sm:$0xf]
        %v536 = vld [vmem:[#allocation7 + $0x20] sm:$0xf]
        %v537 = vld [vmem:[#allocation7 + $0x24] sm:$0xf]
        %v538 = vld [vmem:[#allocation7 + $0x28] sm:$0xf]
        %v539 = vld [vmem:[#allocation7 + $0x2c] sm:$0xf]
        %v540 = vld [vmem:[#allocation7 + $0x30] sm:$0xf]
        %v541 = vld [vmem:[#allocation7 + $0x34] sm:$0xf]
        %v542 = vld [vmem:[#allocation7 + $0x38] sm:$0xf]
        %v543 = vld [vmem:[#allocation7 + $0x3c] sm:$0xf]
        %v544 = vld [vmem:[%s4] sm:$0x1]
        %v545 = vpack.c.bf16 %v527, %v526
        %v547 = vlaneseq
        %v548 = vshrl.u32 %v547, 7
        %v549 = vsub.s32 0, %v548
        %v550 = vrot.slane %v544, %v549
        %v568 = vunpack.c.l.b16 %v528
        %v569 = vunpack.c.l.b16 %v529
        %v570 = vunpack.c.l.b16 %v530
        %v571 = vunpack.c.l.b16 %v531
        %v572 = vunpack.c.l.b16 %v532
        %v573 = vunpack.c.l.b16 %v533
        %v574 = vunpack.c.l.b16 %v534
        %v575 = vunpack.c.l.b16 %v535
        %v576 = vunpack.c.l.b16 %v536
        %v577 = vunpack.c.l.b16 %v537
        %v578 = vunpack.c.l.b16 %v538
        %v579 = vunpack.c.l.b16 %v539
        %v580 = vunpack.c.l.b16 %v540
        %v581 = vunpack.c.l.b16 %v541
        %v582 = vunpack.c.l.b16 %v542
        %v583 = vunpack.c.l.b16 %v543
        %v584 = vpack.c.b16 %v569, %v568
        %v585 = vpack.c.b16 %v571, %v570
        %v586 = vpack.c.b16 %v573, %v572
        %v587 = vpack.c.b16 %v575, %v574
        %v588 = vpack.c.b16 %v577, %v576
        %v589 = vpack.c.b16 %v579, %v578
        %v590 = vpack.c.b16 %v581, %v580
        %v591 = vpack.c.b16 %v583, %v582
        %600 = vmatprep.subr.bf16.mxu0 0
        %601 = vmatpush1.bf16.msra.mxu0 %v591
        %602 = vmatprep.subr.bf16.mxu0 0
        %603 = vmatpush1.bf16.msra.mxu0 %v590
        %604 = vmatprep.subr.bf16.mxu0 0
        %605 = vmatpush1.bf16.msra.mxu0 %v589
        %606 = vmatprep.subr.bf16.mxu0 0
        %607 = vmatpush1.bf16.msra.mxu0 %v588
        %608 = vmatprep.subr.bf16.mxu0 0
        %609 = vmatpush1.bf16.msra.mxu0 %v587
        %610 = vmatprep.subr.bf16.mxu0 0
        %611 = vmatpush1.bf16.msra.mxu0 %v586
        %612 = vmatprep.subr.bf16.mxu0 0
        %613 = vmatpush1.bf16.msra.mxu0 %v585
        %614 = vmatprep.subr.bf16.mxu0 0
        %615 = vmatpush1.bf16.msra.mxu0 %v584
        %616 = vmatprep.subr.bf16.mxu0 0
        %617 = vmatpush2.bf16.msra.mxu0 0
        %618 = vmatprep.subr.bf16.mxu0 0
        %619 = vmatpush2.bf16.msra.mxu0 0
        %620 = vmatprep.subr.bf16.mxu0 0
        %621 = vmatpush2.bf16.msra.mxu0 0
        %622 = vmatprep.subr.bf16.mxu0 0
        %623 = vmatpush2.bf16.msra.mxu0 0
        %624 = vmatprep.subr.bf16.mxu0 0
        %625 = vmatpush2.bf16.msra.mxu0 0
        %626 = vmatprep.subr.bf16.mxu0 0
        %627 = vmatpush2.bf16.msra.mxu0 0
        %628 = vmatprep.subr.bf16.mxu0 0
        %629 = vmatpush2.bf16.msra.mxu0 0
        %630 = vmatprep.subr.bf16.mxu0 0
        %631 = vmatpush2.bf16.msra.mxu0 0
        %632 = vmatprep.mubr.bf16.mxu0 0
        %633 = vmatmul.mubr.bf16.gmra.mxu0 %v545
        %v634 = vpop.f32.mrf.mxu0
        %v635 = vadd.f32 %v550, %v634
        %v636 = vpop.f32.mrf.mxu0
        %v637 = vpop.f32.mrf.mxu0
        %v638 = vadd.f32 %v550, %v637
        %v639 = vpop.f32.mrf.mxu0
        %640 = vdwg.mxu0
        %v641 = vmax.f32 %v635, 0.0
        %v642 = vmax.f32 %v638, 0.0
        %v643 = vld [vmem:[#allocation8] sm:$0xff]
        %v644 = vld [vmem:[#allocation8 + $0x8] sm:$0xff]
        %v645 = vld [vmem:[#allocation8 + $0x10] sm:$0xff]
        %v646 = vld [vmem:[#allocation8 + $0x18] sm:$0xff]
        %v647 = vld [vmem:[#allocation8 + $0x20] sm:$0xff]
        %v648 = vld [vmem:[#allocation8 + $0x28] sm:$0xff]
        %v649 = vld [vmem:[#allocation8 + $0x30] sm:$0xff]
        %v650 = vld [vmem:[#allocation8 + $0x38] sm:$0xff]
        %v651 = vld [vmem:[#allocation8 + $0x40] sm:$0xff]
        %v652 = vld [vmem:[#allocation8 + $0x48] sm:$0xff]
        %v653 = vld [vmem:[#allocation8 + $0x50] sm:$0xff]
        %v654 = vld [vmem:[#allocation8 + $0x58] sm:$0xff]
        %v655 = vld [vmem:[#allocation8 + $0x60] sm:$0xff]
        %v656 = vld [vmem:[#allocation8 + $0x68] sm:$0xff]
        %v657 = vld [vmem:[#allocation8 + $0x70] sm:$0xff]
        %v658 = vld [vmem:[#allocation8 + $0x78] sm:$0xff]
        %v659 = vld [vmem:[%s6] sm:$0x3]
        %v660 = vpack.c.bf16 %v642, %v641
        %v662 = vlaneseq
        %v663 = vshrl.u32 %v662, 7
        %v664 = vsub.s32 0, %v663
        %v665 = vrot.slane %v659, %v664
        %v666 = vlaneseq
        %v667 = vshrl.u32 %v666, 7
        %v668 = vsub.s32 1, %v667
        %v669 = vrot.slane %v659, %v668
        %v688 = vunpack.c.l.b16 %v643
        %v689 = vunpack.c.h.b16 %v643
        %v690 = vunpack.c.l.b16 %v644
        %v691 = vunpack.c.h.b16 %v644
        %v692 = vunpack.c.l.b16 %v645
        %v693 = vunpack.c.h.b16 %v645
        %v694 = vunpack.c.l.b16 %v646
        %v695 = vunpack.c.h.b16 %v646
        %v696 = vunpack.c.l.b16 %v647
        %v697 = vunpack.c.h.b16 %v647
        %v698 = vunpack.c.l.b16 %v648
        %v699 = vunpack.c.h.b16 %v648
        %v700 = vunpack.c.l.b16 %v649
        %v701 = vunpack.c.h.b16 %v649
        %v702 = vunpack.c.l.b16 %v650
        %v703 = vunpack.c.h.b16 %v650
        %v704 = vunpack.c.l.b16 %v651
        %v705 = vunpack.c.h.b16 %v651
        %v706 = vunpack.c.l.b16 %v652
        %v707 = vunpack.c.h.b16 %v652
        %v708 = vunpack.c.l.b16 %v653
        %v709 = vunpack.c.h.b16 %v653
        %v710 = vunpack.c.l.b16 %v654
        %v711 = vunpack.c.h.b16 %v654
        %v712 = vunpack.c.l.b16 %v655
        %v713 = vunpack.c.h.b16 %v655
        %v714 = vunpack.c.l.b16 %v656
        %v715 = vunpack.c.h.b16 %v656
        %v716 = vunpack.c.l.b16 %v657
        %v717 = vunpack.c.h.b16 %v657
        %v718 = vunpack.c.l.b16 %v658
        %v719 = vunpack.c.h.b16 %v658
        %v720 = vpack.c.b16 %v690, %v688
        %v721 = vpack.c.b16 %v691, %v689
        %v722 = vpack.c.b16 %v694, %v692
        %v723 = vpack.c.b16 %v695, %v693
        %v724 = vpack.c.b16 %v698, %v696
        %v725 = vpack.c.b16 %v699, %v697
        %v726 = vpack.c.b16 %v702, %v700
        %v727 = vpack.c.b16 %v703, %v701
        %v728 = vpack.c.b16 %v706, %v704
        %v729 = vpack.c.b16 %v707, %v705
        %v730 = vpack.c.b16 %v710, %v708
        %v731 = vpack.c.b16 %v711, %v709
        %v732 = vpack.c.b16 %v714, %v712
        %v733 = vpack.c.b16 %v715, %v713
        %v734 = vpack.c.b16 %v718, %v716
        %v735 = vpack.c.b16 %v719, %v717
        %752 = vmatprep.subr.bf16.mxu0 %v735
        %753 = vmatpush1.bf16.msra.mxu0 %v734
        %754 = vmatprep.subr.bf16.mxu0 %v733
        %755 = vmatpush1.bf16.msra.mxu0 %v732
        %756 = vmatprep.subr.bf16.mxu0 %v731
        %757 = vmatpush1.bf16.msra.mxu0 %v730
        %758 = vmatprep.subr.bf16.mxu0 %v729
        %759 = vmatpush1.bf16.msra.mxu0 %v728
        %760 = vmatprep.subr.bf16.mxu0 %v727
        %761 = vmatpush1.bf16.msra.mxu0 %v726
        %762 = vmatprep.subr.bf16.mxu0 %v725
        %763 = vmatpush1.bf16.msra.mxu0 %v724
        %764 = vmatprep.subr.bf16.mxu0 %v723
        %765 = vmatpush1.bf16.msra.mxu0 %v722
        %766 = vmatprep.subr.bf16.mxu0 %v721
        %767 = vmatpush1.bf16.msra.mxu0 %v720
        %768 = vmatprep.subr.bf16.mxu0 0
        %769 = vmatpush2.bf16.msra.mxu0 0
        %770 = vmatprep.subr.bf16.mxu0 0
        %771 = vmatpush2.bf16.msra.mxu0 0
        %772 = vmatprep.subr.bf16.mxu0 0
        %773 = vmatpush2.bf16.msra.mxu0 0
        %774 = vmatprep.subr.bf16.mxu0 0
        %775 = vmatpush2.bf16.msra.mxu0 0
        %776 = vmatprep.subr.bf16.mxu0 0
        %777 = vmatpush2.bf16.msra.mxu0 0
        %778 = vmatprep.subr.bf16.mxu0 0
        %779 = vmatpush2.bf16.msra.mxu0 0
        %780 = vmatprep.subr.bf16.mxu0 0
        %781 = vmatpush2.bf16.msra.mxu0 0
        %782 = vmatprep.subr.bf16.mxu0 0
        %783 = vmatpush2.bf16.msra.mxu0 0
        %784 = vmatprep.mubr.bf16.mxu0 0
        %785 = vmatmul.mubr.bf16.gmra.mxu0 %v660
        %v786 = vpop.f32.mrf.mxu0
        %v787 = vadd.f32 %v665, %v786
        %v788 = vpop.f32.mrf.mxu0
        %v789 = vadd.f32 %v669, %v788
        %v790 = vpop.f32.mrf.mxu0
        %v791 = vadd.f32 %v665, %v790
        %v792 = vpop.f32.mrf.mxu0
        %v793 = vadd.f32 %v669, %v792
        %794 = vdwg.mxu0
        %v795 = vmul.f32 %v787, %v787
        %v796 = vmul.f32 %v789, %v789
        %v797 = vmul.f32 %v791, %v791
        %v798 = vmul.f32 %v793, %v793
        %v799 = vadd.f32 %v795, %v796
        %800 = vadd.xlane.f32.xlu0 %v799
        %v801 = vpop.xlane.xlu0 %800
        %v802 = vadd.f32 %v797, %v798
        %803 = vadd.xlane.f32.xlu0 %v802
        %v804 = vpop.xlane.xlu0 %803
        %v805 = vmax.f32 %v801, 1e-24
        %v806 = vmax.f32 %v804, 1e-24
        %v807 = vrsqrt.pop %v805
        %v808 = vrsqrt.pop %v806
        %v809 = vmul.f32 %v787, %v807
        %v810 = vmul.f32 %v789, %v807
        %v811 = vmul.f32 %v791, %v808
        %v812 = vmul.f32 %v793, %v808
        %v813 = vsub.f32 %v809, %v344
        %v814 = vsub.f32 %v810, %v345
        %v815 = vsub.f32 %v811, %v346
        %v816 = vsub.f32 %v812, %v347
        %v817 = vmul.f32 %v813, %v813
        %v818 = vmul.f32 %v814, %v814
        %v819 = vmul.f32 %v815, %v815
        %v820 = vmul.f32 %v816, %v816
        %v821 = vadd.f32 %v817, %v818
        %822 = vadd.xlane.f32.xlu0 %v821
        %v823 = vpop.xlane.xlu0 %822
        %v824 = vadd.f32 %v819, %v820
        %825 = vadd.xlane.f32.xlu0 %v824
        %v826 = vpop.xlane.xlu0 %825
        %v827 = vrsqrt.pop %v823
        %v828 = vmul.f32 %v823, %v827
        %vm829 = vcmp.eq.f32.partialorder %v823, inf
        %v830 = vsel %vm829, %v823, %v828
        %vm831 = vcmp.eq.f32.partialorder %v823, 0.0
        %v832 = vand.u32 %v823, 2147483648
        %v833 = vsel %vm831, %v832, %v830
        %v834 = vrsqrt.pop %v826
        %v835 = vmul.f32 %v826, %v834
        %vm836 = vcmp.eq.f32.partialorder %v826, inf
        %v837 = vsel %vm836, %v826, %v835
        %vm838 = vcmp.eq.f32.partialorder %v826, 0.0
        %v839 = vand.u32 %v826, 2147483648
        %v840 = vsel %vm838, %v839, %v837
        %s841 = smul.u32 %s26, 16
        %v842 = vlaneseq
        %v843 = vshrl.u32 %v842, 7
        %v844 = vadd.s32 %v843, 8
        %v845 = vstv %s841
        %v846 = vadd.s32 %v845, %v843
        %v847 = vadd.s32 %v845, %v844
        %vm848 = vcmp.lt.s32.totalorder %v846, 20
        %vm849 = vcmp.lt.s32.totalorder %v847, 20
        %v850 = vsel %vm848, 1, 0
        %v851 = vsel %vm849, 1, 0
        %v852 = vcvt.s32.f32 %v850
        %v853 = vcvt.s32.f32 %v851
        %v854 = vmul.f32 %v833, %v852
        %v855 = vmul.f32 %v840, %v853
        %vm856 = vcmask 7168
        %v857 = vsel %vm856, %v854, 0.0
        %v858 = vsel %vm856, %v855, 0.0
        %v859 = vadd.f32 %v857, %v858
        %860 = vadd.xlane.f32.xlu0 %v859
        %v861 = vpop.xlane.xlu0 %860
        %v862 = vrot.slane %v861, 4
        %v863 = vadd.f32 %v861, %v862
        %v864 = vrot.slane %v863, 2
        %v865 = vadd.f32 %v863, %v864
        %v866 = vrot.slane %v865, 1
        %v867 = vadd.f32 %v865, %v866
        %s868 = vtos %v867
        %v869 = vstv %s868
        %870 = vst [vmem:[%s341] sm:$0xff] %v869
        %s871 = sand.u32 %s186, 1
        %s872 = scalar_lea.sflag [#allocation4], %s871
        %s873 = sand.u32 %s186, 1
        %s874 = smul.addr %s873, 8
        %s875 = scalar_lea.vmem [#allocation10], %s874
        // Predicated region
        $region65: #{tpu_custom_call.1} parent=47 // pred_check
          %p876 = pneg %p196
        $region66: #{tpu_custom_call.1} parent=47 // pred_check_branch
          %878 = sbr.rel (%p876) target = $region68
        $region67: #{tpu_custom_call.1} parent=47 // pred_region
          %s880 = ssub.s32 128, 128
          %881 = vsyncadd %s872, %s880
          %s882 = smul.addr %s26, 128
          %s883 = scalar_lea.hbm %s7, %s882
          %s885 = sshll.u32 %s875, 4
          %s886 = int_to_ptr.vmem [resolvable:$true] %s885
          %888 = dma.vmem_to_hbm [thread:$0]  %s886, 128, %s883, %s872
        $region68: #{tpu_custom_call.1} parent=47 // pred_fallthru
          _
      $region48: #{tpu_custom_call.1} parent=5 // pred_fallthru
        _
      %p889 = scmp.le.s32.totalorder 2, %s21
      // Predicated region
      $region69: #{tpu_custom_call.1} parent=5 // pred_check
        %p890 = pneg %p889
      $region70: #{tpu_custom_call.1} parent=5 // pred_check_branch
        %892 = sbr.rel (%p890) target = $region72
      $region71: #{tpu_custom_call.1} parent=5 // pred_region
        %s893 = ssub.s32 %s21, 2
        // Predicated region
        $region73: #{tpu_custom_call.1} parent=71 // pred_check
          %p894 = pneg %p202
        $region74: #{tpu_custom_call.1} parent=71 // pred_check_branch
          %896 = sbr.rel (%p894) target = $region76
        $region75: #{tpu_custom_call.1} parent=71 // pred_region
          %s897 = sand.u32 %s187, 1
          %s898 = scalar_lea.sflag [#allocation4], %s897
          %s899 = sand.u32 %s187, 1
          %s900 = smul.addr %s899, 8
          %s901 = scalar_lea.vmem [#allocation10], %s900
          %902 = dma.done %s898, 128
        $region76: #{tpu_custom_call.1} parent=71 // pred_fallthru
          _
      $region72: #{tpu_custom_call.1} parent=5 // pred_fallthru
        _
    $region6: #{tpu_custom_call.1} parent=1 // loop_footer
      %s25 = sadd.s32 1, %s21
    $region7: #{tpu_custom_call.1} parent=1 // loop_footer_branch
      %20 = sbr.rel target = $region3
    $region8: #{tpu_custom_call.1} parent=1 // loop_exit
      _
    %903 = vsyncpa [#allocation3], 1
    %s904 = scalar_lea.sflag [#allocation3], 1
    %905 = vsyncpa %s904, 1
    %906 = vsyncpa [#allocation6], 1
    %907 = vsyncpa [#allocation9], 1
    %908 = vsyncpa [#allocation4], 1
    %s909 = scalar_lea.sflag [#allocation4], 1
    %910 = vsyncpa %s909, 1

// kernel: tpu_custom_call.1
$region0: #{tpu_custom_call.1}
  #allocation0 [shape = 'u32[]', space=smem, size = 0x4, offset = 0x4, fixed_abs, tag = 'smem constant byte address 0x4 - core index']
  #allocation1 [shape = 'u32[144,128]{1,0:T(1,128)}', space=vmem, size = 0x12000, scoped, tag = 'internal scratch']
  %s0 = inlined_call_operand.hbm [shape: f32[32,256], index: 0, kind: input, shape index: {}]
  %s1 = inlined_call_operand.hbm [shape: bf16[256,128], index: 1, kind: input, shape index: {}]
  %s2 = inlined_call_operand.vmem [shape: f32[1,128], index: 2, kind: input, shape index: {}]
  %s3 = inlined_call_operand.hbm [shape: bf16[128,128], index: 3, kind: input, shape index: {}]
  %s4 = inlined_call_operand.vmem [shape: f32[1,128], index: 4, kind: input, shape index: {}]
  %s5 = inlined_call_operand.hbm [shape: bf16[128,256], index: 5, kind: input, shape index: {}]
  %s6 = inlined_call_operand.vmem [shape: f32[1,256], index: 6, kind: input, shape index: {}]
  %s7 = inlined_call_operand.hbm [shape: f32[2,8,128], index: 7, kind: output, shape index: {}]
  %s8 = sld [smem:[#allocation0]]
  $region77: #{tpu_custom_call.1} parent=0
    _
  %s10 = ssub.s32 1, %s8
  %s11 = scalar_select 0, %s10, %s8
  $region1: #{tpu_custom_call.1} parent=0
    #allocation2 [shape = 'u8[32768]{0}', space=vmem, size = 0x8000, scoped, tag = 'input window, operand 0']
    #allocation3 [shape = 's32[2]{0}', space=sflag, size = 0x8, scoped, tag = 'scoped memory for tpu_custom_call.1']
    #allocation4 [shape = 's32[2]{0}', space=sflag, size = 0x8, scoped, tag = 'scoped memory for tpu_custom_call.1']
    #allocation5 [shape = 'u8[65536]{0}', space=vmem, size = 0x10000, scoped, tag = 'input window, operand 1, single buffered']
    #allocation6 [shape = 's32[1]{0}', space=sflag, size = 0x4, scoped, tag = 'scoped memory for tpu_custom_call.1']
    #allocation7 [shape = 'u8[32768]{0}', space=vmem, size = 0x8000, scoped, tag = 'input window, operand 3, single buffered']
    #allocation8 [shape = 'u8[65536]{0}', space=vmem, size = 0x10000, scoped, tag = 'input window, operand 5, single buffered']
    #allocation9 [shape = 's32[1]{0}', space=sflag, size = 0x4, scoped, tag = 'scoped memory for tpu_custom_call.1']
    #allocation10 [shape = 'u8[8192]{0}', space=vmem, size = 0x2000, scoped, tag = 'output window, operand 0']
    %12 = vsyncpa [#allocation3], 0
    %s13 = scalar_lea.sflag [#allocation3], 1
    %14 = vsyncpa %s13, 0
    %15 = vsyncpa [#allocation6], 0
    %16 = vsyncpa [#allocation9], 0
    %17 = vsyncpa [#allocation4], 0
    %s18 = scalar_lea.sflag [#allocation4], 1
    %19 = vsyncpa %s18, 0
    loop: start=0, step=1, limit=4
    $region2: #{tpu_custom_call.1} parent=1 // loop_pre_header
      _
    $region3: #{tpu_custom_call.1} parent=1 // loop_header
      %s21 = sphi 0, %s25
      %p22 = scmp.ge.s32.totalorder %s21, 4
      %s31 = sphi 0, %s33
      %s34 = sphi 0, %s31
      %s35 = sphi 0, %s34
      %s51 = sphi 0, %s35
      %s55 = sphi 0, %s55
      %s57 = sphi 0, %s55
      %s58 = sphi 0, %s57
      %s72 = sphi 0, %s58
      %s76 = sphi 0, %s76
      %s78 = sphi 0, %s76
      %s79 = sphi 0, %s78
      %s93 = sphi 0, %s79
      %s97 = sphi 0, %s97
      %s99 = sphi 0, %s97
      %s100 = sphi 0, %s99
      %s114 = sphi 0, %s100
      %s118 = sphi 0, %s118
      %s120 = sphi 0, %s118
      %s121 = sphi 0, %s120
      %s135 = sphi 0, %s121
      %s139 = sphi 0, %s139
      %s141 = sphi 0, %s139
      %s142 = sphi 0, %s141
      %s156 = sphi 0, %s142
      %s160 = sphi 0, %s160
      %s162 = sphi 0, %s160
      %s163 = sphi 0, %s162
      %s177 = sphi 0, %s163
      %s183 = sphi 0, %s185
      %s186 = sphi 0, %s183
      %s187 = sphi 0, %s186
      %s203 = sphi 0, %s187
    $region4: #{tpu_custom_call.1} parent=1 // loop_header_branch
      %24 = sbr.rel (%p22) target = $region8
    $region5: #{tpu_custom_call.1} parent=1 // loop_body
      %s26 = ssub.s32 %s21, 1
      %s27 = ssub.s32 %s21, 2
      %s28 = sadd.s32 %s21, 1
      %s29 = ssub.s32 %s21, %s28
      %p30 = scmp.eq.s32.totalorder %s29, 0
      %s32 = sadd.s32 %s31, 1
      %s33 = scalar_select %p30, %s31, %s32
      %p36 = pneg %p30
      %p37 = scmp.eq.s32.totalorder %s21, 1
      %p38 = por %p36, %p37
      %p39 = scmp.ne.s32.totalorder %s31, %s34
      %p40 = scmp.eq.s32.totalorder %s21, 0
      %p41 = por %p39, %p40
      %p42 = scmp.ne.s32.totalorder %s31, %s34
      %p43 = scmp.eq.s32.totalorder %s26, 1
      %p44 = por %p42, %p43
      %p45 = scmp.ne.s32.totalorder %s34, %s35
      %p46 = scmp.eq.s32.totalorder %s26, 0
      %p47 = por %p45, %p46
      %p48 = scmp.ne.s32.totalorder %s34, %s35
      %p49 = scmp.eq.s32.totalorder %s27, 1
      %p50 = por %p48, %p49
      %p52 = scmp.ne.s32.totalorder %s35, %s51
      %p53 = scmp.eq.s32.totalorder %s27, 0
      %p54 = por %p52, %p53
      %s56 = sadd.s32 %s55, 1
      %p59 = scmp.eq.s32.totalorder %s21, 1
      %p60 = scmp.ne.s32.totalorder %s55, %s57
      %p61 = scmp.eq.s32.totalorder %s21, 0
      %p62 = por %p60, %p61
      %p63 = scmp.ne.s32.totalorder %s55, %s57
      %p64 = scmp.eq.s32.totalorder %s26, 1
      %p65 = por %p63, %p64
      %p66 = scmp.ne.s32.totalorder %s57, %s58
      %p67 = scmp.eq.s32.totalorder %s26, 0
      %p68 = por %p66, %p67
      %p69 = scmp.ne.s32.totalorder %s57, %s58
      %p70 = scmp.eq.s32.totalorder %s27, 1
      %p71 = por %p69, %p70
      %p73 = scmp.ne.s32.totalorder %s58, %s72
      %p74 = scmp.eq.s32.totalorder %s27, 0
      %p75 = por %p73, %p74
      %s77 = sadd.s32 %s76, 1
      %p80 = scmp.eq.s32.totalorder %s21, 1
      %p81 = scmp.ne.s32.totalorder %s76, %s78
      %p82 = scmp.eq.s32.totalorder %s21, 0
      %p83 = por %p81, %p82
      %p84 = scmp.ne.s32.totalorder %s76, %s78
      %p85 = scmp.eq.s32.totalorder %s26, 1
      %p86 = por %p84, %p85
      %p87 = scmp.ne.s32.totalorder %s78, %s79
      %p88 = scmp.eq.s32.totalorder %s26, 0
      %p89 = por %p87, %p88
      %p90 = scmp.ne.s32.totalorder %s78, %s79
      %p91 = scmp.eq.s32.totalorder %s27, 1
      %p92 = por %p90, %p91
      %p94 = scmp.ne.s32.totalorder %s79, %s93
      %p95 = scmp.eq.s32.totalorder %s27, 0
      %p96 = por %p94, %p95
      %s98 = sadd.s32 %s97, 1
      %p101 = scmp.eq.s32.totalorder %s21, 1
      %p102 = scmp.ne.s32.totalorder %s97, %s99
      %p103 = scmp.eq.s32.totalorder %s21, 0
      %p104 = por %p102, %p103
      %p105 = scmp.ne.s32.totalorder %s97, %s99
      %p106 = scmp.eq.s32.totalorder %s26, 1
      %p107 = por %p105, %p106
      %p108 = scmp.ne.s32.totalorder %s99, %s100
      %p109 = scmp.eq.s32.totalorder %s26, 0
      %p110 = por %p108, %p109
      %p111 = scmp.ne.s32.totalorder %s99, %s100
      %p112 = scmp.eq.s32.totalorder %s27, 1
      %p113 = por %p111, %p112
      %p115 = scmp.ne.s32.totalorder %s100, %s114
      %p116 = scmp.eq.s32.totalorder %s27, 0
      %p117 = por %p115, %p116
      %s119 = sadd.s32 %s118, 1
      %p122 = scmp.eq.s32.totalorder %s21, 1
      %p123 = scmp.ne.s32.totalorder %s118, %s120
      %p124 = scmp.eq.s32.totalorder %s21, 0
      %p125 = por %p123, %p124
      %p126 = scmp.ne.s32.totalorder %s118, %s120
      %p127 = scmp.eq.s32.totalorder %s26, 1
      %p128 = por %p126, %p127
      %p129 = scmp.ne.s32.totalorder %s120, %s121
      %p130 = scmp.eq.s32.totalorder %s26, 0
      %p131 = por %p129, %p130
      %p132 = scmp.ne.s32.totalorder %s120, %s121
      %p133 = scmp.eq.s32.totalorder %s27, 1
      %p134 = por %p132, %p133
      %p136 = scmp.ne.s32.totalorder %s121, %s135
      %p137 = scmp.eq.s32.totalorder %s27, 0
      %p138 = por %p136, %p137
      %s140 = sadd.s32 %s139, 1
      %p143 = scmp.eq.s32.totalorder %s21, 1
      %p144 = scmp.ne.s32.totalorder %s139, %s141
      %p145 = scmp.eq.s32.totalorder %s21, 0
      %p146 = por %p144, %p145
      %p147 = scmp.ne.s32.totalorder %s139, %s141
      %p148 = scmp.eq.s32.totalorder %s26, 1
      %p149 = por %p147, %p148
      %p150 = scmp.ne.s32.totalorder %s141, %s142
      %p151 = scmp.eq.s32.totalorder %s26, 0
      %p152 = por %p150, %p151
      %p153 = scmp.ne.s32.totalorder %s141, %s142
      %p154 = scmp.eq.s32.totalorder %s27, 1
      %p155 = por %p153, %p154
      %p157 = scmp.ne.s32.totalorder %s142, %s156
      %p158 = scmp.eq.s32.totalorder %s27, 0
      %p159 = por %p157, %p158
      %s161 = sadd.s32 %s160, 1
      %p164 = scmp.eq.s32.totalorder %s21, 1
      %p165 = scmp.ne.s32.totalorder %s160, %s162
      %p166 = scmp.eq.s32.totalorder %s21, 0
      %p167 = por %p165, %p166
      %p168 = scmp.ne.s32.totalorder %s160, %s162
      %p169 = scmp.eq.s32.totalorder %s26, 1
      %p170 = por %p168, %p169
      %p171 = scmp.ne.s32.totalorder %s162, %s163
      %p172 = scmp.eq.s32.totalorder %s26, 0
      %p173 = por %p171, %p172
      %p174 = scmp.ne.s32.totalorder %s162, %s163
      %p175 = scmp.eq.s32.totalorder %s27, 1
      %p176 = por %p174, %p175
      %p178 = scmp.ne.s32.totalorder %s163, %s177
      %p179 = scmp.eq.s32.totalorder %s27, 0
      %p180 = por %p178, %p179
      %s181 = ssub.s32 %s21, %s28
      %p182 = scmp.eq.s32.totalorder %s181, 0
      %s184 = sadd.s32 %s183, 1
      %s185 = scalar_select %p182, %s183, %s184
      %p188 = pneg %p182
      %p189 = scmp.eq.s32.totalorder %s21, 1
      %p190 = por %p188, %p189
      %p191 = scmp.ne.s32.totalorder %s183, %s186
      %p192 = scmp.eq.s32.totalorder %s21, 0
      %p193 = por %p191, %p192
      %p194 = scmp.ne.s32.totalorder %s183, %s186
      %p195 = scmp.eq.s32.totalorder %s26, 1
      %p196 = por %p194, %p195
      %p197 = scmp.ne.s32.totalorder %s186, %s187
      %p198 = scmp.eq.s32.totalorder %s26, 0
      %p199 = por %p197, %p198
      %p200 = scmp.ne.s32.totalorder %s186, %s187
      %p201 = scmp.eq.s32.totalorder %s27, 1
      %p202 = por %p200, %p201
      %p204 = scmp.ne.s32.totalorder %s187, %s203
      %p205 = scmp.eq.s32.totalorder %s27, 0
      %p206 = por %p204, %p205
      %p207 = scmp.le.s32.totalorder 1, %s21
      %p208 = scmp.lt.s32.totalorder %s21, 3
      %p209 = pnand %p207, %p208
      %p210 = pneg %p209
      // Predicated region
      $region9: #{tpu_custom_call.1} parent=5 // pred_check
        _
      $region10: #{tpu_custom_call.1} parent=5 // pred_check_branch
        %212 = sbr.rel (%p209) target = $region12
      $region11: #{tpu_custom_call.1} parent=5 // pred_region
        %s213 = ssub.s32 %s21, 1
        // Predicated region
        $region13: #{tpu_custom_call.1} parent=11 // pred_check
          %p214 = pneg %p68
        $region14: #{tpu_custom_call.1} parent=11 // pred_check_branch
          %216 = sbr.rel (%p214) target = $region16
        $region15: #{tpu_custom_call.1} parent=11 // pred_region
          %s218 = ssub.s32 2048, 2048
          %219 = vsyncadd [#allocation6], %s218
          %s220 = sshll.u32 [#allocation5], 4
          %s221 = int_to_ptr.vmem [resolvable:$true] %s220
          %226 = dma.hbm_to_vmem [thread:$0]  %s1, 2048, %s221, [#allocation6], 64, 64, 4
        $region16: #{tpu_custom_call.1} parent=11 // pred_fallthru
          _
        // Predicated region
        $region17: #{tpu_custom_call.1} parent=11 // pred_check
          %p227 = pneg %p89
        $region18: #{tpu_custom_call.1} parent=11 // pred_check_branch
          %229 = sbr.rel (%p227) target = $region20
        $region19: #{tpu_custom_call.1} parent=11 // pred_region
          _
        $region20: #{tpu_custom_call.1} parent=11 // pred_fallthru
          _
        // Predicated region
        $region21: #{tpu_custom_call.1} parent=11 // pred_check
          %p230 = pneg %p110
        $region22: #{tpu_custom_call.1} parent=11 // pred_check_branch
          %232 = sbr.rel (%p230) target = $region24
        $region23: #{tpu_custom_call.1} parent=11 // pred_region
          %s234 = ssub.s32 1024, 1024
          %235 = vsyncadd [#allocation6], %s234
          %s236 = sshll.u32 [#allocation7], 4
          %s237 = int_to_ptr.vmem [resolvable:$true] %s236
          %242 = dma.hbm_to_vmem [thread:$0]  %s3, 1024, %s237, [#allocation6], 64, 64, 4
        $region24: #{tpu_custom_call.1} parent=11 // pred_fallthru
          _
        // Predicated region
        $region25: #{tpu_custom_call.1} parent=11 // pred_check
          %p243 = pneg %p131
        $region26: #{tpu_custom_call.1} parent=11 // pred_check_branch
          %245 = sbr.rel (%p243) target = $region28
        $region27: #{tpu_custom_call.1} parent=11 // pred_region
          _
        $region28: #{tpu_custom_call.1} parent=11 // pred_fallthru
          _
        // Predicated region
        $region29: #{tpu_custom_call.1} parent=11 // pred_check
          %p246 = pneg %p152
        $region30: #{tpu_custom_call.1} parent=11 // pred_check_branch
          %248 = sbr.rel (%p246) target = $region32
        $region31: #{tpu_custom_call.1} parent=11 // pred_region
          %s250 = ssub.s32 2048, 2048
          %251 = vsyncadd [#allocation9], %s250
          %s252 = sshll.u32 [#allocation8], 4
          %s253 = int_to_ptr.vmem [resolvable:$true] %s252
          %258 = dma.hbm_to_vmem [thread:$0]  %s5, 2048, %s253, [#allocation9], 128, 128, 8
        $region32: #{tpu_custom_call.1} parent=11 // pred_fallthru
          _
        // Predicated region
        $region33: #{tpu_custom_call.1} parent=11 // pred_check
          %p259 = pneg %p173
        $region34: #{tpu_custom_call.1} parent=11 // pred_check_branch
          %261 = sbr.rel (%p259) target = $region36
        $region35: #{tpu_custom_call.1} parent=11 // pred_region
          _
        $region36: #{tpu_custom_call.1} parent=11 // pred_fallthru
          _
      $region12: #{tpu_custom_call.1} parent=5 // pred_fallthru
        _
      %p262 = scmp.lt.s32.totalorder %s21, 2
      // Predicated region
      $region37: #{tpu_custom_call.1} parent=5 // pred_check
        %p263 = pneg %p262
      $region38: #{tpu_custom_call.1} parent=5 // pred_check_branch
        %265 = sbr.rel (%p263) target = $region40
      $region39: #{tpu_custom_call.1} parent=5 // pred_region
        // Predicated region
        $region41: #{tpu_custom_call.1} parent=39 // pred_check
          %p266 = pneg %p41
        $region42: #{tpu_custom_call.1} parent=39 // pred_check_branch
          %268 = sbr.rel (%p266) target = $region44
        $region43: #{tpu_custom_call.1} parent=39 // pred_region
          %s269 = sand.u32 %s31, 1
          %s270 = scalar_lea.sflag [#allocation3], %s269
          %s271 = sand.u32 %s31, 1
          %s272 = smul.addr %s271, 32
          %s273 = scalar_lea.vmem [#allocation2], %s272
          %s274 = smul.u32 2, %s21
          %s276 = ssub.s32 512, 512
          %277 = vsyncadd %s270, %s276
          %s278 = smul.addr %s274, 2
          %s279 = smul.addr %s278, 128
          %s280 = scalar_lea.hbm %s0, %s279
          %s281 = sshll.u32 %s273, 4
          %s282 = int_to_ptr.vmem [resolvable:$true] %s281
          %287 = dma.hbm_to_vmem [thread:$0]  %s280, 512, %s282, %s270, 256, 256, 16
        $region44: #{tpu_custom_call.1} parent=39 // pred_fallthru
          _
      $region40: #{tpu_custom_call.1} parent=5 // pred_fallthru
        _
      %p288 = scmp.le.s32.totalorder 1, %s21
      %p289 = scmp.lt.s32.totalorder %s21, 3
      %p290 = pnand %p288, %p289
      %p291 = pneg %p290
      // Predicated region
      $region45: #{tpu_custom_call.1} parent=5 // pred_check
        _
      $region46: #{tpu_custom_call.1} parent=5 // pred_check_branch
        %293 = sbr.rel (%p290) target = $region48
      $region47: #{tpu_custom_call.1} parent=5 // pred_region
        %s294 = ssub.s32 %s21, 1
        %s295 = sand.u32 %s34, 1
        %s296 = scalar_lea.sflag [#allocation3], %s295
        %s297 = sand.u32 %s34, 1
        %s298 = smul.addr %s297, 32
        %s299 = scalar_lea.vmem [#allocation2], %s298
        // Predicated region
        $region49: #{tpu_custom_call.1} parent=47 // pred_check
          %p300 = pneg %p47
        $region50: #{tpu_custom_call.1} parent=47 // pred_check_branch
          %302 = sbr.rel (%p300) target = $region52
        $region51: #{tpu_custom_call.1} parent=47 // pred_region
          %303 = dma.done %s296, 512
        $region52: #{tpu_custom_call.1} parent=47 // pred_fallthru
          _
        // Predicated region
        $region53: #{tpu_custom_call.1} parent=47 // pred_check
          %p304 = pneg %p68
        $region54: #{tpu_custom_call.1} parent=47 // pred_check_branch
          %306 = sbr.rel (%p304) target = $region56
        $region55: #{tpu_custom_call.1} parent=47 // pred_region
          %307 = dma.done [#allocation6], 2048
        $region56: #{tpu_custom_call.1} parent=47 // pred_fallthru
          _
        // Predicated region
        $region57: #{tpu_custom_call.1} parent=47 // pred_check
          %p308 = pneg %p110
        $region58: #{tpu_custom_call.1} parent=47 // pred_check_branch
          %310 = sbr.rel (%p308) target = $region60
        $region59: #{tpu_custom_call.1} parent=47 // pred_region
          %311 = dma.done [#allocation6], 1024
        $region60: #{tpu_custom_call.1} parent=47 // pred_fallthru
          _
        // Predicated region
        $region61: #{tpu_custom_call.1} parent=47 // pred_check
          %p312 = pneg %p152
        $region62: #{tpu_custom_call.1} parent=47 // pred_check_branch
          %314 = sbr.rel (%p312) target = $region64
        $region63: #{tpu_custom_call.1} parent=47 // pred_region
          %315 = dma.done [#allocation9], 2048
        $region64: #{tpu_custom_call.1} parent=47 // pred_fallthru
          _
        %s316 = sand.u32 %s34, 1
        %s317 = scalar_lea.sflag [#allocation3], %s316
        %s318 = sand.u32 %s34, 1
        %s319 = smul.addr %s318, 32
        %s320 = scalar_lea.vmem [#allocation2], %s319
        %p321 = pneg %p47
        %p322 = pneg %p44
        %p323 = pneg %p68
        %p324 = pneg %p65
        %p325 = pneg %p89
        %p326 = pneg %p86
        %p327 = pneg %p110
        %p328 = pneg %p107
        %p329 = pneg %p131
        %p330 = pneg %p128
        %p331 = pneg %p152
        %p332 = pneg %p149
        %p333 = pneg %p173
        %p334 = pneg %p170
        %p335 = pneg %p199
        %p336 = pneg %p196
        %s337 = sand.u32 %s186, 1
        %s338 = scalar_lea.sflag [#allocation4], %s337
        %s339 = sand.u32 %s186, 1
        %s340 = smul.addr %s339, 8
        %s341 = scalar_lea.vmem [#allocation10], %s340
        %s342 = smul.u32 2, %s26
        %v344 = vld [vmem:[%s299] sm:$0xff]
        %v345 = vld [vmem:[%s299 + $0x8] sm:$0xff]
        %v346 = vld [vmem:[%s299 + $0x10] sm:$0xff]
        %v347 = vld [vmem:[%s299 + $0x18] sm:$0xff]
        %v348 = vld [vmem:[#allocation5] sm:$0xf]
        %v349 = vld [vmem:[#allocation5 + $0x4] sm:$0xf]
        %v350 = vld [vmem:[#allocation5 + $0x8] sm:$0xf]
        %v351 = vld [vmem:[#allocation5 + $0xc] sm:$0xf]
        %v352 = vld [vmem:[#allocation5 + $0x10] sm:$0xf]
        %v353 = vld [vmem:[#allocation5 + $0x14] sm:$0xf]
        %v354 = vld [vmem:[#allocation5 + $0x18] sm:$0xf]
        %v355 = vld [vmem:[#allocation5 + $0x1c] sm:$0xf]
        %v356 = vld [vmem:[#allocation5 + $0x20] sm:$0xf]
        %v357 = vld [vmem:[#allocation5 + $0x24] sm:$0xf]
        %v358 = vld [vmem:[#allocation5 + $0x28] sm:$0xf]
        %v359 = vld [vmem:[#allocation5 + $0x2c] sm:$0xf]
        %v360 = vld [vmem:[#allocation5 + $0x30] sm:$0xf]
        %v361 = vld [vmem:[#allocation5 + $0x34] sm:$0xf]
        %v362 = vld [vmem:[#allocation5 + $0x38] sm:$0xf]
        %v363 = vld [vmem:[#allocation5 + $0x3c] sm:$0xf]
        %v364 = vld [vmem:[#allocation5 + $0x40] sm:$0xf]
        %v365 = vld [vmem:[#allocation5 + $0x44] sm:$0xf]
        %v366 = vld [vmem:[#allocation5 + $0x48] sm:$0xf]
        %v367 = vld [vmem:[#allocation5 + $0x4c] sm:$0xf]
        %v368 = vld [vmem:[#allocation5 + $0x50] sm:$0xf]
        %v369 = vld [vmem:[#allocation5 + $0x54] sm:$0xf]
        %v370 = vld [vmem:[#allocation5 + $0x58] sm:$0xf]
        %v371 = vld [vmem:[#allocation5 + $0x5c] sm:$0xf]
        %v372 = vld [vmem:[#allocation5 + $0x60] sm:$0xf]
        %v373 = vld [vmem:[#allocation5 + $0x64] sm:$0xf]
        %v374 = vld [vmem:[#allocation5 + $0x68] sm:$0xf]
        %v375 = vld [vmem:[#allocation5 + $0x6c] sm:$0xf]
        %v376 = vld [vmem:[#allocation5 + $0x70] sm:$0xf]
        %v377 = vld [vmem:[#allocation5 + $0x74] sm:$0xf]
        %v378 = vld [vmem:[#allocation5 + $0x78] sm:$0xf]
        %v379 = vld [vmem:[#allocation5 + $0x7c] sm:$0xf]
        %v380 = vld [vmem:[%s2] sm:$0x1]
        %v381 = vpack.c.bf16 %v346, %v344
        %v382 = vpack.c.bf16 %v347, %v345
        %v384 = vlaneseq
        %v385 = vshrl.u32 %v384, 7
        %v386 = vsub.s32 0, %v385
        %v387 = vrot.slane %v380, %v386
        %v421 = vunpack.c.l.b16 %v348
        %v422 = vunpack.c.l.b16 %v349
        %v423 = vunpack.c.l.b16 %v350
        %v424 = vunpack.c.l.b16 %v351
        %v425 = vunpack.c.l.b16 %v352
        %v426 = vunpack.c.l.b16 %v353
        %v427 = vunpack.c.l.b16 %v354
        %v428 = vunpack.c.l.b16 %v355
        %v429 = vunpack.c.l.b16 %v356
        %v430 = vunpack.c.l.b16 %v357
        %v431 = vunpack.c.l.b16 %v358
        %v432 = vunpack.c.l.b16 %v359
        %v433 = vunpack.c.l.b16 %v360
        %v434 = vunpack.c.l.b16 %v361
        %v435 = vunpack.c.l.b16 %v362
        %v436 = vunpack.c.l.b16 %v363
        %v437 = vunpack.c.l.b16 %v364
        %v438 = vunpack.c.l.b16 %v365
        %v439 = vunpack.c.l.b16 %v366
        %v440 = vunpack.c.l.b16 %v367
        %v441 = vunpack.c.l.b16 %v368
        %v442 = vunpack.c.l.b16 %v369
        %v443 = vunpack.c.l.b16 %v370
        %v444 = vunpack.c.l.b16 %v371
        %v445 = vunpack.c.l.b16 %v372
        %v446 = vunpack.c.l.b16 %v373
        %v447 = vunpack.c.l.b16 %v374
        %v448 = vunpack.c.l.b16 %v375
        %v449 = vunpack.c.l.b16 %v376
        %v450 = vunpack.c.l.b16 %v377
        %v451 = vunpack.c.l.b16 %v378
        %v452 = vunpack.c.l.b16 %v379
        %v453 = vpack.c.b16 %v422, %v421
        %v454 = vpack.c.b16 %v424, %v423
        %v455 = vpack.c.b16 %v426, %v425
        %v456 = vpack.c.b16 %v428, %v427
        %v457 = vpack.c.b16 %v430, %v429
        %v458 = vpack.c.b16 %v432, %v431
        %v459 = vpack.c.b16 %v434, %v433
        %v460 = vpack.c.b16 %v436, %v435
        %v461 = vpack.c.b16 %v438, %v437
        %v462 = vpack.c.b16 %v440, %v439
        %v463 = vpack.c.b16 %v442, %v441
        %v464 = vpack.c.b16 %v444, %v443
        %v465 = vpack.c.b16 %v446, %v445
        %v466 = vpack.c.b16 %v448, %v447
        %v467 = vpack.c.b16 %v450, %v449
        %v468 = vpack.c.b16 %v452, %v451
        %485 = vmatprep.subr.bf16.mxu0 0
        %486 = vmatpush1.bf16.msra.mxu0 %v460
        %487 = vmatprep.subr.bf16.mxu0 0
        %488 = vmatpush1.bf16.msra.mxu0 %v459
        %489 = vmatprep.subr.bf16.mxu0 0
        %490 = vmatpush1.bf16.msra.mxu0 %v458
        %491 = vmatprep.subr.bf16.mxu0 0
        %492 = vmatpush1.bf16.msra.mxu0 %v457
        %493 = vmatprep.subr.bf16.mxu0 0
        %494 = vmatpush1.bf16.msra.mxu0 %v456
        %495 = vmatprep.subr.bf16.mxu0 0
        %496 = vmatpush1.bf16.msra.mxu0 %v455
        %497 = vmatprep.subr.bf16.mxu0 0
        %498 = vmatpush1.bf16.msra.mxu0 %v454
        %499 = vmatprep.subr.bf16.mxu0 0
        %500 = vmatpush1.bf16.msra.mxu0 %v453
        %501 = vmatprep.subr.bf16.mxu0 0
        %502 = vmatpush2.bf16.msra.mxu0 %v468
        %503 = vmatprep.subr.bf16.mxu0 0
        %504 = vmatpush2.bf16.msra.mxu0 %v467
        %505 = vmatprep.subr.bf16.mxu0 0
        %506 = vmatpush2.bf16.msra.mxu0 %v466
        %507 = vmatprep.subr.bf16.mxu0 0
        %508 = vmatpush2.bf16.msra.mxu0 %v465
        %509 = vmatprep.subr.bf16.mxu0 0
        %510 = vmatpush2.bf16.msra.mxu0 %v464
        %511 = vmatprep.subr.bf16.mxu0 0
        %512 = vmatpush2.bf16.msra.mxu0 %v463
        %513 = vmatprep.subr.bf16.mxu0 0
        %514 = vmatpush2.bf16.msra.mxu0 %v462
        %515 = vmatprep.subr.bf16.mxu0 0
        %516 = vmatpush2.bf16.msra.mxu0 %v461
        %517 = vmatprep.mubr.bf16.mxu0 %v382
        %518 = vmatmul.mubr.bf16.gmra.mxu0 %v381
        %v519 = vpop.f32.mrf.mxu0
        %v520 = vadd.f32 %v387, %v519
        %v521 = vpop.f32.mrf.mxu0
        %v522 = vpop.f32.mrf.mxu0
        %v523 = vadd.f32 %v387, %v522
        %v524 = vpop.f32.mrf.mxu0
        %525 = vdwg.mxu0
        %v526 = vmax.f32 %v520, 0.0
        %v527 = vmax.f32 %v523, 0.0
        %v528 = vld [vmem:[#allocation7] sm:$0xf]
        %v529 = vld [vmem:[#allocation7 + $0x4] sm:$0xf]
        %v530 = vld [vmem:[#allocation7 + $0x8] sm:$0xf]
        %v531 = vld [vmem:[#allocation7 + $0xc] sm:$0xf]
        %v532 = vld [vmem:[#allocation7 + $0x10] sm:$0xf]
        %v533 = vld [vmem:[#allocation7 + $0x14] sm:$0xf]
        %v534 = vld [vmem:[#allocation7 + $0x18] sm:$0xf]
        %v535 = vld [vmem:[#allocation7 + $0x1c] sm:$0xf]
        %v536 = vld [vmem:[#allocation7 + $0x20] sm:$0xf]
        %v537 = vld [vmem:[#allocation7 + $0x24] sm:$0xf]
        %v538 = vld [vmem:[#allocation7 + $0x28] sm:$0xf]
        %v539 = vld [vmem:[#allocation7 + $0x2c] sm:$0xf]
        %v540 = vld [vmem:[#allocation7 + $0x30] sm:$0xf]
        %v541 = vld [vmem:[#allocation7 + $0x34] sm:$0xf]
        %v542 = vld [vmem:[#allocation7 + $0x38] sm:$0xf]
        %v543 = vld [vmem:[#allocation7 + $0x3c] sm:$0xf]
        %v544 = vld [vmem:[%s4] sm:$0x1]
        %v545 = vpack.c.bf16 %v527, %v526
        %v547 = vlaneseq
        %v548 = vshrl.u32 %v547, 7
        %v549 = vsub.s32 0, %v548
        %v550 = vrot.slane %v544, %v549
        %v568 = vunpack.c.l.b16 %v528
        %v569 = vunpack.c.l.b16 %v529
        %v570 = vunpack.c.l.b16 %v530
        %v571 = vunpack.c.l.b16 %v531
        %v572 = vunpack.c.l.b16 %v532
        %v573 = vunpack.c.l.b16 %v533
        %v574 = vunpack.c.l.b16 %v534
        %v575 = vunpack.c.l.b16 %v535
        %v576 = vunpack.c.l.b16 %v536
        %v577 = vunpack.c.l.b16 %v537
        %v578 = vunpack.c.l.b16 %v538
        %v579 = vunpack.c.l.b16 %v539
        %v580 = vunpack.c.l.b16 %v540
        %v581 = vunpack.c.l.b16 %v541
        %v582 = vunpack.c.l.b16 %v542
        %v583 = vunpack.c.l.b16 %v543
        %v584 = vpack.c.b16 %v569, %v568
        %v585 = vpack.c.b16 %v571, %v570
        %v586 = vpack.c.b16 %v573, %v572
        %v587 = vpack.c.b16 %v575, %v574
        %v588 = vpack.c.b16 %v577, %v576
        %v589 = vpack.c.b16 %v579, %v578
        %v590 = vpack.c.b16 %v581, %v580
        %v591 = vpack.c.b16 %v583, %v582
        %600 = vmatprep.subr.bf16.mxu0 0
        %601 = vmatpush1.bf16.msra.mxu0 %v591
        %602 = vmatprep.subr.bf16.mxu0 0
        %603 = vmatpush1.bf16.msra.mxu0 %v590
        %604 = vmatprep.subr.bf16.mxu0 0
        %605 = vmatpush1.bf16.msra.mxu0 %v589
        %606 = vmatprep.subr.bf16.mxu0 0
        %607 = vmatpush1.bf16.msra.mxu0 %v588
        %608 = vmatprep.subr.bf16.mxu0 0
        %609 = vmatpush1.bf16.msra.mxu0 %v587
        %610 = vmatprep.subr.bf16.mxu0 0
        %611 = vmatpush1.bf16.msra.mxu0 %v586
        %612 = vmatprep.subr.bf16.mxu0 0
        %613 = vmatpush1.bf16.msra.mxu0 %v585
        %614 = vmatprep.subr.bf16.mxu0 0
        %615 = vmatpush1.bf16.msra.mxu0 %v584
        %616 = vmatprep.subr.bf16.mxu0 0
        %617 = vmatpush2.bf16.msra.mxu0 0
        %618 = vmatprep.subr.bf16.mxu0 0
        %619 = vmatpush2.bf16.msra.mxu0 0
        %620 = vmatprep.subr.bf16.mxu0 0
        %621 = vmatpush2.bf16.msra.mxu0 0
        %622 = vmatprep.subr.bf16.mxu0 0
        %623 = vmatpush2.bf16.msra.mxu0 0
        %624 = vmatprep.subr.bf16.mxu0 0
        %625 = vmatpush2.bf16.msra.mxu0 0
        %626 = vmatprep.subr.bf16.mxu0 0
        %627 = vmatpush2.bf16.msra.mxu0 0
        %628 = vmatprep.subr.bf16.mxu0 0
        %629 = vmatpush2.bf16.msra.mxu0 0
        %630 = vmatprep.subr.bf16.mxu0 0
        %631 = vmatpush2.bf16.msra.mxu0 0
        %632 = vmatprep.mubr.bf16.mxu0 0
        %633 = vmatmul.mubr.bf16.gmra.mxu0 %v545
        %v634 = vpop.f32.mrf.mxu0
        %v635 = vadd.f32 %v550, %v634
        %v636 = vpop.f32.mrf.mxu0
        %v637 = vpop.f32.mrf.mxu0
        %v638 = vadd.f32 %v550, %v637
        %v639 = vpop.f32.mrf.mxu0
        %640 = vdwg.mxu0
        %v641 = vmax.f32 %v635, 0.0
        %v642 = vmax.f32 %v638, 0.0
        %v643 = vld [vmem:[#allocation8] sm:$0xff]
        %v644 = vld [vmem:[#allocation8 + $0x8] sm:$0xff]
        %v645 = vld [vmem:[#allocation8 + $0x10] sm:$0xff]
        %v646 = vld [vmem:[#allocation8 + $0x18] sm:$0xff]
        %v647 = vld [vmem:[#allocation8 + $0x20] sm:$0xff]
        %v648 = vld [vmem:[#allocation8 + $0x28] sm:$0xff]
        %v649 = vld [vmem:[#allocation8 + $0x30] sm:$0xff]
        %v650 = vld [vmem:[#allocation8 + $0x38] sm:$0xff]
        %v651 = vld [vmem:[#allocation8 + $0x40] sm:$0xff]
        %v652 = vld [vmem:[#allocation8 + $0x48] sm:$0xff]
        %v653 = vld [vmem:[#allocation8 + $0x50] sm:$0xff]
        %v654 = vld [vmem:[#allocation8 + $0x58] sm:$0xff]
        %v655 = vld [vmem:[#allocation8 + $0x60] sm:$0xff]
        %v656 = vld [vmem:[#allocation8 + $0x68] sm:$0xff]
        %v657 = vld [vmem:[#allocation8 + $0x70] sm:$0xff]
        %v658 = vld [vmem:[#allocation8 + $0x78] sm:$0xff]
        %v659 = vld [vmem:[%s6] sm:$0x3]
        %v660 = vpack.c.bf16 %v642, %v641
        %v662 = vlaneseq
        %v663 = vshrl.u32 %v662, 7
        %v664 = vsub.s32 0, %v663
        %v665 = vrot.slane %v659, %v664
        %v666 = vlaneseq
        %v667 = vshrl.u32 %v666, 7
        %v668 = vsub.s32 1, %v667
        %v669 = vrot.slane %v659, %v668
        %v688 = vunpack.c.l.b16 %v643
        %v689 = vunpack.c.h.b16 %v643
        %v690 = vunpack.c.l.b16 %v644
        %v691 = vunpack.c.h.b16 %v644
        %v692 = vunpack.c.l.b16 %v645
        %v693 = vunpack.c.h.b16 %v645
        %v694 = vunpack.c.l.b16 %v646
        %v695 = vunpack.c.h.b16 %v646
        %v696 = vunpack.c.l.b16 %v647
        %v697 = vunpack.c.h.b16 %v647
        %v698 = vunpack.c.l.b16 %v648
        %v699 = vunpack.c.h.b16 %v648
        %v700 = vunpack.c.l.b16 %v649
        %v701 = vunpack.c.h.b16 %v649
        %v702 = vunpack.c.l.b16 %v650
        %v703 = vunpack.c.h.b16 %v650
        %v704 = vunpack.c.l.b16 %v651
        %v705 = vunpack.c.h.b16 %v651
        %v706 = vunpack.c.l.b16 %v652
        %v707 = vunpack.c.h.b16 %v652
        %v708 = vunpack.c.l.b16 %v653
        %v709 = vunpack.c.h.b16 %v653
        %v710 = vunpack.c.l.b16 %v654
        %v711 = vunpack.c.h.b16 %v654
        %v712 = vunpack.c.l.b16 %v655
        %v713 = vunpack.c.h.b16 %v655
        %v714 = vunpack.c.l.b16 %v656
        %v715 = vunpack.c.h.b16 %v656
        %v716 = vunpack.c.l.b16 %v657
        %v717 = vunpack.c.h.b16 %v657
        %v718 = vunpack.c.l.b16 %v658
        %v719 = vunpack.c.h.b16 %v658
        %v720 = vpack.c.b16 %v690, %v688
        %v721 = vpack.c.b16 %v691, %v689
        %v722 = vpack.c.b16 %v694, %v692
        %v723 = vpack.c.b16 %v695, %v693
        %v724 = vpack.c.b16 %v698, %v696
        %v725 = vpack.c.b16 %v699, %v697
        %v726 = vpack.c.b16 %v702, %v700
        %v727 = vpack.c.b16 %v703, %v701
        %v728 = vpack.c.b16 %v706, %v704
        %v729 = vpack.c.b16 %v707, %v705
        %v730 = vpack.c.b16 %v710, %v708
        %v731 = vpack.c.b16 %v711, %v709
        %v732 = vpack.c.b16 %v714, %v712
        %v733 = vpack.c.b16 %v715, %v713
        %v734 = vpack.c.b16 %v718, %v716
        %v735 = vpack.c.b16 %v719, %v717
        %752 = vmatprep.subr.bf16.mxu0 %v735
        %753 = vmatpush1.bf16.msra.mxu0 %v734
        %754 = vmatprep.subr.bf16.mxu0 %v733
        %755 = vmatpush1.bf16.msra.mxu0 %v732
        %756 = vmatprep.subr.bf16.mxu0 %v731
        %757 = vmatpush1.bf16.msra.mxu0 %v730
        %758 = vmatprep.subr.bf16.mxu0 %v729
        %759 = vmatpush1.bf16.msra.mxu0 %v728
        %760 = vmatprep.subr.bf16.mxu0 %v727
        %761 = vmatpush1.bf16.msra.mxu0 %v726
        %762 = vmatprep.subr.bf16.mxu0 %v725
        %763 = vmatpush1.bf16.msra.mxu0 %v724
        %764 = vmatprep.subr.bf16.mxu0 %v723
        %765 = vmatpush1.bf16.msra.mxu0 %v722
        %766 = vmatprep.subr.bf16.mxu0 %v721
        %767 = vmatpush1.bf16.msra.mxu0 %v720
        %768 = vmatprep.subr.bf16.mxu0 0
        %769 = vmatpush2.bf16.msra.mxu0 0
        %770 = vmatprep.subr.bf16.mxu0 0
        %771 = vmatpush2.bf16.msra.mxu0 0
        %772 = vmatprep.subr.bf16.mxu0 0
        %773 = vmatpush2.bf16.msra.mxu0 0
        %774 = vmatprep.subr.bf16.mxu0 0
        %775 = vmatpush2.bf16.msra.mxu0 0
        %776 = vmatprep.subr.bf16.mxu0 0
        %777 = vmatpush2.bf16.msra.mxu0 0
        %778 = vmatprep.subr.bf16.mxu0 0
        %779 = vmatpush2.bf16.msra.mxu0 0
        %780 = vmatprep.subr.bf16.mxu0 0
        %781 = vmatpush2.bf16.msra.mxu0 0
        %782 = vmatprep.subr.bf16.mxu0 0
        %783 = vmatpush2.bf16.msra.mxu0 0
        %784 = vmatprep.mubr.bf16.mxu0 0
        %785 = vmatmul.mubr.bf16.gmra.mxu0 %v660
        %v786 = vpop.f32.mrf.mxu0
        %v787 = vadd.f32 %v665, %v786
        %v788 = vpop.f32.mrf.mxu0
        %v789 = vadd.f32 %v669, %v788
        %v790 = vpop.f32.mrf.mxu0
        %v791 = vadd.f32 %v665, %v790
        %v792 = vpop.f32.mrf.mxu0
        %v793 = vadd.f32 %v669, %v792
        %794 = vdwg.mxu0
        %v795 = vmul.f32 %v787, %v787
        %v796 = vmul.f32 %v789, %v789
        %v797 = vmul.f32 %v791, %v791
        %v798 = vmul.f32 %v793, %v793
        %v799 = vadd.f32 %v795, %v796
        %800 = vadd.xlane.f32.xlu0 %v799
        %v801 = vpop.xlane.xlu0 %800
        %v802 = vadd.f32 %v797, %v798
        %803 = vadd.xlane.f32.xlu0 %v802
        %v804 = vpop.xlane.xlu0 %803
        %v805 = vmax.f32 %v801, 1e-24
        %v806 = vmax.f32 %v804, 1e-24
        %v807 = vrsqrt.pop %v805
        %v808 = vrsqrt.pop %v806
        %v809 = vmul.f32 %v787, %v807
        %v810 = vmul.f32 %v789, %v807
        %v811 = vmul.f32 %v791, %v808
        %v812 = vmul.f32 %v793, %v808
        %v813 = vsub.f32 %v809, %v344
        %v814 = vsub.f32 %v810, %v345
        %v815 = vsub.f32 %v811, %v346
        %v816 = vsub.f32 %v812, %v347
        %v817 = vmul.f32 %v813, %v813
        %v818 = vmul.f32 %v814, %v814
        %v819 = vmul.f32 %v815, %v815
        %v820 = vmul.f32 %v816, %v816
        %v821 = vadd.f32 %v817, %v818
        %822 = vadd.xlane.f32.xlu0 %v821
        %v823 = vpop.xlane.xlu0 %822
        %v824 = vadd.f32 %v819, %v820
        %825 = vadd.xlane.f32.xlu0 %v824
        %v826 = vpop.xlane.xlu0 %825
        %v827 = vrsqrt.pop %v823
        %v828 = vmul.f32 %v823, %v827
        %vm829 = vcmp.eq.f32.partialorder %v823, inf
        %v830 = vsel %vm829, %v823, %v828
        %vm831 = vcmp.eq.f32.partialorder %v823, 0.0
        %v832 = vand.u32 %v823, 2147483648
        %v833 = vsel %vm831, %v832, %v830
        %v834 = vrsqrt.pop %v826
        %v835 = vmul.f32 %v826, %v834
        %vm836 = vcmp.eq.f32.partialorder %v826, inf
        %v837 = vsel %vm836, %v826, %v835
        %vm838 = vcmp.eq.f32.partialorder %v826, 0.0
        %v839 = vand.u32 %v826, 2147483648
        %v840 = vsel %vm838, %v839, %v837
        %s841 = smul.u32 %s26, 16
        %v842 = vlaneseq
        %v843 = vshrl.u32 %v842, 7
        %v844 = vadd.s32 %v843, 8
        %v845 = vstv %s841
        %v846 = vadd.s32 %v845, %v843
        %v847 = vadd.s32 %v845, %v844
        %vm848 = vcmp.lt.s32.totalorder %v846, 20
        %vm849 = vcmp.lt.s32.totalorder %v847, 20
        %v850 = vsel %vm848, 1, 0
        %v851 = vsel %vm849, 1, 0
        %v852 = vcvt.s32.f32 %v850
        %v853 = vcvt.s32.f32 %v851
        %v854 = vmul.f32 %v833, %v852
        %v855 = vmul.f32 %v840, %v853
        %vm856 = vcmask 7168
        %v857 = vsel %vm856, %v854, 0.0
        %v858 = vsel %vm856, %v855, 0.0
        %v859 = vadd.f32 %v857, %v858
        %860 = vadd.xlane.f32.xlu0 %v859
        %v861 = vpop.xlane.xlu0 %860
        %v862 = vrot.slane %v861, 4
        %v863 = vadd.f32 %v861, %v862
        %v864 = vrot.slane %v863, 2
        %v865 = vadd.f32 %v863, %v864
        %v866 = vrot.slane %v865, 1
        %v867 = vadd.f32 %v865, %v866
        %s868 = vtos %v867
        %v869 = vstv %s868
        %870 = vst [vmem:[%s341] sm:$0xff] %v869
        %s871 = sand.u32 %s186, 1
        %s872 = scalar_lea.sflag [#allocation4], %s871
        %s873 = sand.u32 %s186, 1
        %s874 = smul.addr %s873, 8
        %s875 = scalar_lea.vmem [#allocation10], %s874
        // Predicated region
        $region65: #{tpu_custom_call.1} parent=47 // pred_check
          %p876 = pneg %p196
        $region66: #{tpu_custom_call.1} parent=47 // pred_check_branch
          %878 = sbr.rel (%p876) target = $region68
        $region67: #{tpu_custom_call.1} parent=47 // pred_region
          %s880 = ssub.s32 128, 128
          %881 = vsyncadd %s872, %s880
          %s882 = smul.addr %s26, 128
          %s883 = scalar_lea.hbm %s7, %s882
          %s885 = sshll.u32 %s875, 4
          %s886 = int_to_ptr.vmem [resolvable:$true] %s885
          %888 = dma.vmem_to_hbm [thread:$0]  %s886, 128, %s883, %s872
        $region68: #{tpu_custom_call.1} parent=47 // pred_fallthru
          _
      $region48: #{tpu_custom_call.1} parent=5 // pred_fallthru
        _
      %p889 = scmp.le.s32.totalorder 2, %s21
      // Predicated region
      $region69: #{tpu_custom_call.1} parent=5 // pred_check
        %p890 = pneg %p889
      $region70: #{tpu_custom_call.1} parent=5 // pred_check_branch
        %892 = sbr.rel (%p890) target = $region72
      $region71: #{tpu_custom_call.1} parent=5 // pred_region
        %s893 = ssub.s32 %s21, 2
        // Predicated region
        $region73: #{tpu_custom_call.1} parent=71 // pred_check
          %p894 = pneg %p202
        $region74: #{tpu_custom_call.1} parent=71 // pred_check_branch
          %896 = sbr.rel (%p894) target = $region76
        $region75: #{tpu_custom_call.1} parent=71 // pred_region
          %s897 = sand.u32 %s187, 1
          %s898 = scalar_lea.sflag [#allocation4], %s897
          %s899 = sand.u32 %s187, 1
          %s900 = smul.addr %s899, 8
          %s901 = scalar_lea.vmem [#allocation10], %s900
          %902 = dma.done %s898, 128
        $region76: #{tpu_custom_call.1} parent=71 // pred_fallthru
          _
      $region72: #{tpu_custom_call.1} parent=5 // pred_fallthru
        _
    $region6: #{tpu_custom_call.1} parent=1 // loop_footer
      %s25 = sadd.s32 1, %s21
    $region7: #{tpu_custom_call.1} parent=1 // loop_footer_branch
      %20 = sbr.rel target = $region3
    $region8: #{tpu_custom_call.1} parent=1 // loop_exit
      _
    %903 = vsyncpa [#allocation3], 1
    %s904 = scalar_lea.sflag [#allocation3], 1
    %905 = vsyncpa %s904, 1
    %906 = vsyncpa [#allocation6], 1
    %907 = vsyncpa [#allocation9], 1
    %908 = vsyncpa [#allocation4], 1
    %s909 = scalar_lea.sflag [#allocation4], 1
    %910 = vsyncpa %s909, 1

</llo_original>
